<compile_context>
chip_gen: v7x
topology: tpu7x:2x2x1
jax: 0.10.0
libtpu: 0.0.40
codegen_flags: <defaults>
</compile_context>

<pallas_src>
import math
import functools

import jax
import jax.numpy as jnp
from jax.experimental import pallas as pl
from jax.experimental.pallas import tpu as pltpu


def _encoder_layer_kernel(x_ref,
                          wqkv_ref, bqkv_ref, wo_ref, bo_ref,
                          w1_ref, b1_ref, w2_ref, b2_ref,
                          g1_ref, be1_ref, g2_ref, be2_ref,
                          o_ref, *, nhead, approx_recip):
    Bt, L, E = x_ref.shape
    R = Bt * L
    dh = E // nhead
    scale = 1.0 / math.sqrt(dh)
    mm_dtype = wqkv_ref.dtype          # matmul operand dtype (f32 or bf16); accum is f32

    x = x_ref[...].reshape(R, E)       # leading-dim merge only (layout-safe)
    x32 = x.astype(jnp.float32)

    # ---- fused QKV projection: one (R, E) x (E, 3E) MXU pass -----------------
    qkv = jnp.dot(x.astype(mm_dtype), wqkv_ref[...],
                  preferred_element_type=jnp.float32) + bqkv_ref[...]
    q = (qkv[:, 0 * E:1 * E] * scale).astype(mm_dtype)   # scale hoisted onto Q once
    k = qkv[:, 1 * E:2 * E].astype(mm_dtype)
    v = qkv[:, 2 * E:3 * E].astype(mm_dtype)

    wo = wo_ref[...]

    # ---- multi-head attention, batched over the Bt batch elements ------------
    # Static head loop; every dot is an MXU-shaped (batched) dot_general.
    # No kh.T transpose (contraction on the last dims), no concatenate (the
    # out-projection is accumulated per head), softmax normalization deferred.
    attn = jnp.zeros((R, E), jnp.float32)
    for h in range(nhead):
        lo = h * dh
        qh = q[:, lo:lo + dh].reshape(Bt, L, dh)
        kh = k[:, lo:lo + dh].reshape(Bt, L, dh)
        vh = v[:, lo:lo + dh].reshape(Bt, L, dh)

        s = jax.lax.dot_general(qh, kh, (((2,), (2,)), ((0,), (0,))),
                                preferred_element_type=jnp.float32)   # (Bt, L, L)
        s = s - jnp.max(s, axis=-1, keepdims=True)
        p = jnp.exp(s)
        denom = jnp.sum(p, axis=-1, keepdims=True)                    # (Bt, L, 1)

        ctx = jax.lax.dot_general(p.astype(mm_dtype), vh,
                                  (((2,), (1,)), ((0,), (0,))),
                                  preferred_element_type=jnp.float32)  # (Bt, L, dh)
        # deferred normalization: one (Bt, L, dh) scale (EUP reciprocal) instead
        # of dividing the (Bt, L, L) probability matrix on the VPU.
        ctx = ctx * pl.reciprocal(denom, approx=approx_recip)

        attn = attn + jnp.dot(ctx.reshape(R, dh).astype(mm_dtype),
                              wo[lo:lo + dh, :],
                              preferred_element_type=jnp.float32)
    attn = attn + bo_ref[...]

    # ---- residual + LayerNorm 1 (f32) ----------------------------------------
    s1 = x32 + attn
    mu = jnp.mean(s1, axis=-1, keepdims=True)
    var = jnp.mean(jnp.square(s1 - mu), axis=-1, keepdims=True)
    s1 = (s1 - mu) * jax.lax.rsqrt(var + 1e-5) * g1_ref[...] + be1_ref[...]

    # ---- FFN: linear1 -> relu -> linear2 -------------------------------------
    f = jnp.dot(s1.astype(mm_dtype), w1_ref[...],
                preferred_element_type=jnp.float32) + b1_ref[...]
    f = jnp.maximum(f, 0.0)
    f = jnp.dot(f.astype(mm_dtype), w2_ref[...],
                preferred_element_type=jnp.float32) + b2_ref[...]

    # ---- residual + LayerNorm 2 (f32) ----------------------------------------
    y = s1 + f
    mu2 = jnp.mean(y, axis=-1, keepdims=True)
    var2 = jnp.mean(jnp.square(y - mu2), axis=-1, keepdims=True)
    y = (y - mu2) * jax.lax.rsqrt(var2 + 1e-5) * g2_ref[...] + be2_ref[...]

    o_ref[...] = y.reshape(Bt, L, E).astype(o_ref.dtype)


def _pick_batch_block(N, L):
    """Batch elements per grid step: aim for >= 8 sublane rows of work while
    keeping >= 2 (parallel) grid steps when possible (v7x: 2 TensorCores)."""
    target = max(1, 8 // max(L, 1))
    divs = [d for d in range(1, N + 1) if N % d == 0 and d <= target]
    multi_step = [d for d in divs if N // d >= 2]
    if multi_step:
        return max(multi_step)
    return max(divs) if divs else 1


def transformer_encoder_layer(src, params, *, nhead, batch_block=None,
                              compute_dtype=jnp.float32):
    """src: (L, N, E) float32 in PyTorch (seq, batch, embed) layout."""
    L, N, E = src.shape
    F = params["w1"].shape[1]
    assert E % nhead == 0, "d_model must be divisible by nhead"

    Bt = batch_block if batch_block is not None else _pick_batch_block(N, L)
    assert N % Bt == 0, "batch_block must divide the batch size"

    mm = jnp.dtype(compute_dtype)
    approx_recip = (mm != jnp.dtype(jnp.float32))

    # Fused QKV weight/bias: one (E, 3E) matmul in-kernel instead of 3 dots.
    wqkv = jnp.concatenate([params["wq"], params["wk"], params["wv"]], axis=1).astype(mm)
    bqkv = jnp.concatenate([params["bq"], params["bk"], params["bv"]], axis=1)
    wo = params["wo"].astype(mm)
    w1 = params["w1"].astype(mm)
    w2 = params["w2"].astype(mm)

    x = jnp.transpose(src, (1, 0, 2))   # (N, L, E)

    # Grid-invariant weights/biases: untiled VMEM residents (single-buffered).
    def resident():
        return pl.BlockSpec(memory_space=pltpu.MemorySpace.VMEM)

    in_specs = [
        pl.BlockSpec((Bt, L, E), lambda n: (n, 0, 0)),        # x, Bt batches/step
        resident(), resident(),                               # wqkv, bqkv
        resident(), resident(),                               # wo, bo
        resident(), resident(),                               # w1, b1
        resident(), resident(),                               # w2, b2
        resident(), resident(), resident(), resident(),       # ln1/ln2 gamma, beta
    ]

    # Explicit VMEM budget: resident weights (single-buffered) + double-buffered
    # activation blocks + in-register intermediates, with generous headroom.
    wbytes = (E * 3 * E + E * E + E * F + F * E) * mm.itemsize \
             + (3 * E + E + F + 5 * E) * 4
    abytes = Bt * L * (7 * E + F) * 4 + Bt * L * L * 4
    vmem_limit = int(min(64 * 1024 * 1024,
                         max(8 * 1024 * 1024, 2 * wbytes + 8 * abytes)))

    out = pl.pallas_call(
        functools.partial(_encoder_layer_kernel, nhead=nhead,
                          approx_recip=approx_recip),
        out_shape=jax.ShapeDtypeStruct((N, L, E), src.dtype),
        grid=(N // Bt,),
        in_specs=in_specs,
        out_specs=pl.BlockSpec((Bt, L, E), lambda n: (n, 0, 0)),
        compiler_params=pltpu.CompilerParams(
            dimension_semantics=("parallel",),
            vmem_limit_bytes=vmem_limit),
    )(x, wqkv, bqkv, wo, params["bo"], w1, params["b1"], w2, params["b2"],
      params["ln1_g"], params["ln1_b"], params["ln2_g"], params["ln2_b"])

    return jnp.transpose(out, (1, 0, 2))   # back to (L, N, E)


def _reference(src, params, *, nhead):
    """Pure-JAX f32 reference of forward_post (eval mode)."""
    L, N, E = src.shape
    dh = E // nhead
    x = jnp.transpose(src, (1, 0, 2))           # (N, L, E)

    def ln(v, g, b):
        m = jnp.mean(v, axis=-1, keepdims=True)
        var = jnp.mean((v - m) ** 2, axis=-1, keepdims=True)
        return (v - m) / jnp.sqrt(var + 1e-5) * g + b

    q = x @ params["wq"] + params["bq"]
    k = x @ params["wk"] + params["bk"]
    v = x @ params["wv"] + params["bv"]
    q = q.reshape(N, L, nhead, dh).transpose(0, 2, 1, 3) / math.sqrt(dh)
    k = k.reshape(N, L, nhead, dh).transpose(0, 2, 1, 3)
    v = v.reshape(N, L, nhead, dh).transpose(0, 2, 1, 3)
    s = jnp.einsum("nhld,nhmd->nhlm", q, k)
    p = jax.nn.softmax(s, axis=-1)
    a = jnp.einsum("nhlm,nhmd->nhld", p, v).transpose(0, 2, 1, 3).reshape(N, L, E)
    a = a @ params["wo"] + params["bo"]
    src1 = ln(x + a, params["ln1_g"], params["ln1_b"])
    ffn = jnp.maximum(src1 @ params["w1"] + params["b1"], 0.0) @ params["w2"] + params["b2"]
    out = ln(src1 + ffn, params["ln2_g"], params["ln2_b"])
    return jnp.transpose(out, (1, 0, 2))


def make_params(key, d_model, dim_feedforward):
    ks = jax.random.split(key, 10)
    s_in = 1.0 / math.sqrt(d_model)
    s_ff = 1.0 / math.sqrt(dim_feedforward)
    # Weights stored as (in, out): kernel computes x @ W + b (== PyTorch x @ W.T + b).
    return {
        "wq": jax.random.normal(ks[0], (d_model, d_model), jnp.float32) * s_in,
        "wk": jax.random.normal(ks[1], (d_model, d_model), jnp.float32) * s_in,
        "wv": jax.random.normal(ks[2], (d_model, d_model), jnp.float32) * s_in,
        "bq": jax.random.normal(ks[3], (1, d_model), jnp.float32) * 0.02,
        "bk": jax.random.normal(ks[4], (1, d_model), jnp.float32) * 0.02,
        "bv": jax.random.normal(ks[5], (1, d_model), jnp.float32) * 0.02,
        "wo": jax.random.normal(ks[6], (d_model, d_model), jnp.float32) * s_in,
        "bo": jnp.zeros((1, d_model), jnp.float32),
        "w1": jax.random.normal(ks[7], (d_model, dim_feedforward), jnp.float32) * s_in,
        "b1": jnp.zeros((1, dim_feedforward), jnp.float32),
        "w2": jax.random.normal(ks[8], (dim_feedforward, d_model), jnp.float32) * s_ff,
        "b2": jnp.zeros((1, d_model), jnp.float32),
        "ln1_g": jnp.ones((1, d_model), jnp.float32),
        "ln1_b": jnp.zeros((1, d_model), jnp.float32),
        "ln2_g": jnp.ones((1, d_model), jnp.float32),
        "ln2_b": jnp.zeros((1, d_model), jnp.float32),
    }


if __name__ == "__main__":
    L, N, d_model, nhead, dim_ff = 8, 2, 32, 4, 64   # seq, batch, embed, heads, ffn

    key = jax.random.PRNGKey(0)
    k_src, k_par = jax.random.split(key)
    src = jax.random.normal(k_src, (L, N, d_model), jnp.float32)
    params = make_params(k_par, d_model, dim_ff)

    ref = _reference(src, params, nhead=nhead)

    # f32 path: strict correctness vs the reference.
    out = transformer_encoder_layer(src, params, nhead=nhead)
    out = jax.block_until_ready(out)
    assert out.shape == (L, N, d_model)
    assert jnp.allclose(out, ref, atol=1e-4, rtol=1e-4), "mismatch vs JAX reference (f32)"

    # bf16 matmul-operand path (v6e/v7x MXU); softmax/LayerNorm stay f32,
    # f32 accumulation — looser tolerance vs the f32 reference.
    out_bf16 = transformer_encoder_layer(src, params, nhead=nhead,
                                         compute_dtype=jnp.bfloat16)
    out_bf16 = jax.block_until_ready(out_bf16)
    assert float(jnp.max(jnp.abs(out_bf16 - ref))) < 0.2, "bf16 path deviates too much"

    print("KERNEL_OK")
</pallas_src>

<mosaic_0001>
module attributes {stable_mosaic.version = 11 : i64} {
  func.func @_encoder_layer_kernel(%arg0: i32, %arg1: memref<1x8x32xf32, #tpu.memory_space<vmem>>, %arg2: memref<32x96xf32, #tpu.memory_space<vmem>>, %arg3: memref<1x96xf32, #tpu.memory_space<vmem>>, %arg4: memref<32x32xf32, #tpu.memory_space<vmem>>, %arg5: memref<1x32xf32, #tpu.memory_space<vmem>>, %arg6: memref<32x64xf32, #tpu.memory_space<vmem>>, %arg7: memref<1x64xf32, #tpu.memory_space<vmem>>, %arg8: memref<64x32xf32, #tpu.memory_space<vmem>>, %arg9: memref<1x32xf32, #tpu.memory_space<vmem>>, %arg10: memref<1x32xf32, #tpu.memory_space<vmem>>, %arg11: memref<1x32xf32, #tpu.memory_space<vmem>>, %arg12: memref<1x32xf32, #tpu.memory_space<vmem>>, %arg13: memref<1x32xf32, #tpu.memory_space<vmem>>, %arg14: memref<1x8x32xf32, #tpu.memory_space<vmem>>) attributes {dimension_semantics = [#tpu.dimension_semantics<parallel>], iteration_bounds = array<i64: 2>, scalar_prefetch = 0 : i64, scratch_operands = 0 : i64, tpu.core_type = #tpu.core_type<tc>, window_params = [{transform_indices = @transform_0, window_bounds = array<i64: 1, 8, 32>}, {pipeline_mode = #tpu.pipeline_mode<synchronous>, transform_indices = @transform_1, window_bounds = array<i64: 32, 96>}, {pipeline_mode = #tpu.pipeline_mode<synchronous>, transform_indices = @transform_2, window_bounds = array<i64: 1, 96>}, {pipeline_mode = #tpu.pipeline_mode<synchronous>, transform_indices = @transform_3, window_bounds = array<i64: 32, 32>}, {pipeline_mode = #tpu.pipeline_mode<synchronous>, transform_indices = @transform_4, window_bounds = array<i64: 1, 32>}, {pipeline_mode = #tpu.pipeline_mode<synchronous>, transform_indices = @transform_5, window_bounds = array<i64: 32, 64>}, {pipeline_mode = #tpu.pipeline_mode<synchronous>, transform_indices = @transform_6, window_bounds = array<i64: 1, 64>}, {pipeline_mode = #tpu.pipeline_mode<synchronous>, transform_indices = @transform_7, window_bounds = array<i64: 64, 32>}, {pipeline_mode = #tpu.pipeline_mode<synchronous>, transform_indices = @transform_8, window_bounds = array<i64: 1, 32>}, {pipeline_mode = #tpu.pipeline_mode<synchronous>, transform_indices = @transform_9, window_bounds = array<i64: 1, 32>}, {pipeline_mode = #tpu.pipeline_mode<synchronous>, transform_indices = @transform_10, window_bounds = array<i64: 1, 32>}, {pipeline_mode = #tpu.pipeline_mode<synchronous>, transform_indices = @transform_11, window_bounds = array<i64: 1, 32>}, {pipeline_mode = #tpu.pipeline_mode<synchronous>, transform_indices = @transform_12, window_bounds = array<i64: 1, 32>}, {transform_indices = @transform_13, window_bounds = array<i64: 1, 8, 32>}]} {
    %c0 = arith.constant 0 : index
    %c0_0 = arith.constant 0 : index
    %c0_1 = arith.constant 0 : index
    %0 = vector.load %arg1[%c0, %c0_0, %c0_1] : memref<1x8x32xf32, #tpu.memory_space<vmem>>, vector<1x8x32xf32>
    %1 = vector.shape_cast %0 : vector<1x8x32xf32> to vector<8x32xf32>
    %c0_2 = arith.constant 0 : index
    %c0_3 = arith.constant 0 : index
    %2 = vector.load %arg2[%c0_2, %c0_3] : memref<32x96xf32, #tpu.memory_space<vmem>>, vector<32x96xf32>
    %cst = arith.constant dense<0.000000e+00> : vector<8x96xf32>
    %3 = tpu.matmul %1, %2, %cst {dimension_numbers = #tpu.dot_dimension_numbers<[1], [0], [0], [1], [0, 0, 1, 1], [], []>} : vector<8x32xf32>, vector<32x96xf32>, vector<8x96xf32> -> vector<8x96xf32>
    %c0_4 = arith.constant 0 : index
    %c0_5 = arith.constant 0 : index
    %4 = vector.load %arg3[%c0_4, %c0_5] : memref<1x96xf32, #tpu.memory_space<vmem>>, vector<1x96xf32>
    %5 = vector.broadcast %4 : vector<1x96xf32> to vector<8x96xf32>
    %6 = arith.addf %3, %5 : vector<8x96xf32>
    %7 = vector.extract_strided_slice %6 {offsets = [0, 0], sizes = [8, 32], strides = [1, 1]} : vector<8x96xf32> to vector<8x32xf32>
    %cst_6 = arith.constant 0.353553385 : f32
    %8 = vector.broadcast %cst_6 : f32 to vector<8x32xf32>
    %9 = arith.mulf %7, %8 : vector<8x32xf32>
    %10 = vector.extract_strided_slice %6 {offsets = [0, 32], sizes = [8, 32], strides = [1, 1]} : vector<8x96xf32> to vector<8x32xf32>
    %11 = vector.extract_strided_slice %6 {offsets = [0, 64], sizes = [8, 32], strides = [1, 1]} : vector<8x96xf32> to vector<8x32xf32>
    %c0_7 = arith.constant 0 : index
    %c0_8 = arith.constant 0 : index
    %12 = vector.load %arg4[%c0_7, %c0_8] : memref<32x32xf32, #tpu.memory_space<vmem>>, vector<32x32xf32>
    %cst_9 = arith.constant 0.000000e+00 : f32
    %13 = vector.broadcast %cst_9 : f32 to vector<8x32xf32>
    %14 = vector.extract_strided_slice %9 {offsets = [0, 0], sizes = [8, 8], strides = [1, 1]} : vector<8x32xf32> to vector<8x8xf32>
    %15 = vector.shape_cast %14 : vector<8x8xf32> to vector<1x8x8xf32>
    %16 = vector.extract_strided_slice %10 {offsets = [0, 0], sizes = [8, 8], strides = [1, 1]} : vector<8x32xf32> to vector<8x8xf32>
    %17 = vector.shape_cast %16 : vector<8x8xf32> to vector<1x8x8xf32>
    %18 = vector.extract_strided_slice %11 {offsets = [0, 0], sizes = [8, 8], strides = [1, 1]} : vector<8x32xf32> to vector<8x8xf32>
    %19 = vector.shape_cast %18 : vector<8x8xf32> to vector<1x8x8xf32>
    %cst_10 = arith.constant dense<0.000000e+00> : vector<1x8x8xf32>
    %20 = tpu.matmul %15, %17, %cst_10 {dimension_numbers = #tpu.dot_dimension_numbers<[2], [2], [1], [1], [0, 0, 0, 1, 1, 1], [0], [0]>} : vector<1x8x8xf32>, vector<1x8x8xf32>, vector<1x8x8xf32> -> vector<1x8x8xf32>
    %cst_11 = arith.constant dense<0xFF800000> : vector<1x8xf32>
    %21 = vector.multi_reduction <maximumf>, %20, %cst_11 [2] : vector<1x8x8xf32> to vector<1x8xf32>
    %22 = vector.shape_cast %21 : vector<1x8xf32> to vector<1x8x1xf32>
    %23 = vector.broadcast %22 : vector<1x8x1xf32> to vector<1x8x8xf32>
    %24 = arith.subf %20, %23 : vector<1x8x8xf32>
    %25 = math.exp %24 : vector<1x8x8xf32>
    %cst_12 = arith.constant dense<0.000000e+00> : vector<1x8xf32>
    %26 = vector.multi_reduction <add>, %25, %cst_12 [2] : vector<1x8x8xf32> to vector<1x8xf32>
    %27 = vector.shape_cast %26 : vector<1x8xf32> to vector<1x8x1xf32>
    %cst_13 = arith.constant dense<0.000000e+00> : vector<1x8x8xf32>
    %28 = tpu.matmul %25, %19, %cst_13 {dimension_numbers = #tpu.dot_dimension_numbers<[2], [1], [1], [2], [0, 0, 0, 1, 1, 2], [0], [0]>} : vector<1x8x8xf32>, vector<1x8x8xf32>, vector<1x8x8xf32> -> vector<1x8x8xf32>
    %29 = tpu.reciprocal %27 : vector<1x8x1xf32> -> vector<1x8x1xf32>
    %30 = vector.broadcast %29 : vector<1x8x1xf32> to vector<1x8x8xf32>
    %31 = arith.mulf %28, %30 : vector<1x8x8xf32>
    %32 = vector.shape_cast %31 : vector<1x8x8xf32> to vector<8x8xf32>
    %33 = vector.extract_strided_slice %12 {offsets = [0, 0], sizes = [8, 32], strides = [1, 1]} : vector<32x32xf32> to vector<8x32xf32>
    %cst_14 = arith.constant dense<0.000000e+00> : vector<8x32xf32>
    %34 = tpu.matmul %32, %33, %cst_14 {dimension_numbers = #tpu.dot_dimension_numbers<[1], [0], [0], [1], [0, 0, 1, 1], [], []>} : vector<8x8xf32>, vector<8x32xf32>, vector<8x32xf32> -> vector<8x32xf32>
    %35 = arith.addf %13, %34 : vector<8x32xf32>
    %36 = vector.extract_strided_slice %9 {offsets = [0, 8], sizes = [8, 8], strides = [1, 1]} : vector<8x32xf32> to vector<8x8xf32>
    %37 = vector.shape_cast %36 : vector<8x8xf32> to vector<1x8x8xf32>
    %38 = vector.extract_strided_slice %10 {offsets = [0, 8], sizes = [8, 8], strides = [1, 1]} : vector<8x32xf32> to vector<8x8xf32>
    %39 = vector.shape_cast %38 : vector<8x8xf32> to vector<1x8x8xf32>
    %40 = vector.extract_strided_slice %11 {offsets = [0, 8], sizes = [8, 8], strides = [1, 1]} : vector<8x32xf32> to vector<8x8xf32>
    %41 = vector.shape_cast %40 : vector<8x8xf32> to vector<1x8x8xf32>
    %cst_15 = arith.constant dense<0.000000e+00> : vector<1x8x8xf32>
    %42 = tpu.matmul %37, %39, %cst_15 {dimension_numbers = #tpu.dot_dimension_numbers<[2], [2], [1], [1], [0, 0, 0, 1, 1, 1], [0], [0]>} : vector<1x8x8xf32>, vector<1x8x8xf32>, vector<1x8x8xf32> -> vector<1x8x8xf32>
    %cst_16 = arith.constant dense<0xFF800000> : vector<1x8xf32>
    %43 = vector.multi_reduction <maximumf>, %42, %cst_16 [2] : vector<1x8x8xf32> to vector<1x8xf32>
    %44 = vector.shape_cast %43 : vector<1x8xf32> to vector<1x8x1xf32>
    %45 = vector.broadcast %44 : vector<1x8x1xf32> to vector<1x8x8xf32>
    %46 = arith.subf %42, %45 : vector<1x8x8xf32>
    %47 = math.exp %46 : vector<1x8x8xf32>
    %cst_17 = arith.constant dense<0.000000e+00> : vector<1x8xf32>
    %48 = vector.multi_reduction <add>, %47, %cst_17 [2] : vector<1x8x8xf32> to vector<1x8xf32>
    %49 = vector.shape_cast %48 : vector<1x8xf32> to vector<1x8x1xf32>
    %cst_18 = arith.constant dense<0.000000e+00> : vector<1x8x8xf32>
    %50 = tpu.matmul %47, %41, %cst_18 {dimension_numbers = #tpu.dot_dimension_numbers<[2], [1], [1], [2], [0, 0, 0, 1, 1, 2], [0], [0]>} : vector<1x8x8xf32>, vector<1x8x8xf32>, vector<1x8x8xf32> -> vector<1x8x8xf32>
    %51 = tpu.reciprocal %49 : vector<1x8x1xf32> -> vector<1x8x1xf32>
    %52 = vector.broadcast %51 : vector<1x8x1xf32> to vector<1x8x8xf32>
    %53 = arith.mulf %50, %52 : vector<1x8x8xf32>
    %54 = vector.shape_cast %53 : vector<1x8x8xf32> to vector<8x8xf32>
    %55 = vector.extract_strided_slice %12 {offsets = [8, 0], sizes = [8, 32], strides = [1, 1]} : vector<32x32xf32> to vector<8x32xf32>
    %cst_19 = arith.constant dense<0.000000e+00> : vector<8x32xf32>
    %56 = tpu.matmul %54, %55, %cst_19 {dimension_numbers = #tpu.dot_dimension_numbers<[1], [0], [0], [1], [0, 0, 1, 1], [], []>} : vector<8x8xf32>, vector<8x32xf32>, vector<8x32xf32> -> vector<8x32xf32>
    %57 = arith.addf %35, %56 : vector<8x32xf32>
    %58 = vector.extract_strided_slice %9 {offsets = [0, 16], sizes = [8, 8], strides = [1, 1]} : vector<8x32xf32> to vector<8x8xf32>
    %59 = vector.shape_cast %58 : vector<8x8xf32> to vector<1x8x8xf32>
    %60 = vector.extract_strided_slice %10 {offsets = [0, 16], sizes = [8, 8], strides = [1, 1]} : vector<8x32xf32> to vector<8x8xf32>
    %61 = vector.shape_cast %60 : vector<8x8xf32> to vector<1x8x8xf32>
    %62 = vector.extract_strided_slice %11 {offsets = [0, 16], sizes = [8, 8], strides = [1, 1]} : vector<8x32xf32> to vector<8x8xf32>
    %63 = vector.shape_cast %62 : vector<8x8xf32> to vector<1x8x8xf32>
    %cst_20 = arith.constant dense<0.000000e+00> : vector<1x8x8xf32>
    %64 = tpu.matmul %59, %61, %cst_20 {dimension_numbers = #tpu.dot_dimension_numbers<[2], [2], [1], [1], [0, 0, 0, 1, 1, 1], [0], [0]>} : vector<1x8x8xf32>, vector<1x8x8xf32>, vector<1x8x8xf32> -> vector<1x8x8xf32>
    %cst_21 = arith.constant dense<0xFF800000> : vector<1x8xf32>
    %65 = vector.multi_reduction <maximumf>, %64, %cst_21 [2] : vector<1x8x8xf32> to vector<1x8xf32>
    %66 = vector.shape_cast %65 : vector<1x8xf32> to vector<1x8x1xf32>
    %67 = vector.broadcast %66 : vector<1x8x1xf32> to vector<1x8x8xf32>
    %68 = arith.subf %64, %67 : vector<1x8x8xf32>
    %69 = math.exp %68 : vector<1x8x8xf32>
    %cst_22 = arith.constant dense<0.000000e+00> : vector<1x8xf32>
    %70 = vector.multi_reduction <add>, %69, %cst_22 [2] : vector<1x8x8xf32> to vector<1x8xf32>
    %71 = vector.shape_cast %70 : vector<1x8xf32> to vector<1x8x1xf32>
    %cst_23 = arith.constant dense<0.000000e+00> : vector<1x8x8xf32>
    %72 = tpu.matmul %69, %63, %cst_23 {dimension_numbers = #tpu.dot_dimension_numbers<[2], [1], [1], [2], [0, 0, 0, 1, 1, 2], [0], [0]>} : vector<1x8x8xf32>, vector<1x8x8xf32>, vector<1x8x8xf32> -> vector<1x8x8xf32>
    %73 = tpu.reciprocal %71 : vector<1x8x1xf32> -> vector<1x8x1xf32>
    %74 = vector.broadcast %73 : vector<1x8x1xf32> to vector<1x8x8xf32>
    %75 = arith.mulf %72, %74 : vector<1x8x8xf32>
    %76 = vector.shape_cast %75 : vector<1x8x8xf32> to vector<8x8xf32>
    %77 = vector.extract_strided_slice %12 {offsets = [16, 0], sizes = [8, 32], strides = [1, 1]} : vector<32x32xf32> to vector<8x32xf32>
    %cst_24 = arith.constant dense<0.000000e+00> : vector<8x32xf32>
    %78 = tpu.matmul %76, %77, %cst_24 {dimension_numbers = #tpu.dot_dimension_numbers<[1], [0], [0], [1], [0, 0, 1, 1], [], []>} : vector<8x8xf32>, vector<8x32xf32>, vector<8x32xf32> -> vector<8x32xf32>
    %79 = arith.addf %57, %78 : vector<8x32xf32>
    %80 = vector.extract_strided_slice %9 {offsets = [0, 24], sizes = [8, 8], strides = [1, 1]} : vector<8x32xf32> to vector<8x8xf32>
    %81 = vector.shape_cast %80 : vector<8x8xf32> to vector<1x8x8xf32>
    %82 = vector.extract_strided_slice %10 {offsets = [0, 24], sizes = [8, 8], strides = [1, 1]} : vector<8x32xf32> to vector<8x8xf32>
    %83 = vector.shape_cast %82 : vector<8x8xf32> to vector<1x8x8xf32>
    %84 = vector.extract_strided_slice %11 {offsets = [0, 24], sizes = [8, 8], strides = [1, 1]} : vector<8x32xf32> to vector<8x8xf32>
    %85 = vector.shape_cast %84 : vector<8x8xf32> to vector<1x8x8xf32>
    %cst_25 = arith.constant dense<0.000000e+00> : vector<1x8x8xf32>
    %86 = tpu.matmul %81, %83, %cst_25 {dimension_numbers = #tpu.dot_dimension_numbers<[2], [2], [1], [1], [0, 0, 0, 1, 1, 1], [0], [0]>} : vector<1x8x8xf32>, vector<1x8x8xf32>, vector<1x8x8xf32> -> vector<1x8x8xf32>
    %cst_26 = arith.constant dense<0xFF800000> : vector<1x8xf32>
    %87 = vector.multi_reduction <maximumf>, %86, %cst_26 [2] : vector<1x8x8xf32> to vector<1x8xf32>
    %88 = vector.shape_cast %87 : vector<1x8xf32> to vector<1x8x1xf32>
    %89 = vector.broadcast %88 : vector<1x8x1xf32> to vector<1x8x8xf32>
    %90 = arith.subf %86, %89 : vector<1x8x8xf32>
    %91 = math.exp %90 : vector<1x8x8xf32>
    %cst_27 = arith.constant dense<0.000000e+00> : vector<1x8xf32>
    %92 = vector.multi_reduction <add>, %91, %cst_27 [2] : vector<1x8x8xf32> to vector<1x8xf32>
    %93 = vector.shape_cast %92 : vector<1x8xf32> to vector<1x8x1xf32>
    %cst_28 = arith.constant dense<0.000000e+00> : vector<1x8x8xf32>
    %94 = tpu.matmul %91, %85, %cst_28 {dimension_numbers = #tpu.dot_dimension_numbers<[2], [1], [1], [2], [0, 0, 0, 1, 1, 2], [0], [0]>} : vector<1x8x8xf32>, vector<1x8x8xf32>, vector<1x8x8xf32> -> vector<1x8x8xf32>
    %95 = tpu.reciprocal %93 : vector<1x8x1xf32> -> vector<1x8x1xf32>
    %96 = vector.broadcast %95 : vector<1x8x1xf32> to vector<1x8x8xf32>
    %97 = arith.mulf %94, %96 : vector<1x8x8xf32>
    %98 = vector.shape_cast %97 : vector<1x8x8xf32> to vector<8x8xf32>
    %99 = vector.extract_strided_slice %12 {offsets = [24, 0], sizes = [8, 32], strides = [1, 1]} : vector<32x32xf32> to vector<8x32xf32>
    %cst_29 = arith.constant dense<0.000000e+00> : vector<8x32xf32>
    %100 = tpu.matmul %98, %99, %cst_29 {dimension_numbers = #tpu.dot_dimension_numbers<[1], [0], [0], [1], [0, 0, 1, 1], [], []>} : vector<8x8xf32>, vector<8x32xf32>, vector<8x32xf32> -> vector<8x32xf32>
    %101 = arith.addf %79, %100 : vector<8x32xf32>
    %c0_30 = arith.constant 0 : index
    %c0_31 = arith.constant 0 : index
    %102 = vector.load %arg5[%c0_30, %c0_31] : memref<1x32xf32, #tpu.memory_space<vmem>>, vector<1x32xf32>
    %103 = vector.broadcast %102 : vector<1x32xf32> to vector<8x32xf32>
    %104 = arith.addf %101, %103 : vector<8x32xf32>
    %105 = arith.addf %1, %104 : vector<8x32xf32>
    %cst_32 = arith.constant dense<0.000000e+00> : vector<8xf32>
    %106 = vector.multi_reduction <add>, %105, %cst_32 [1] : vector<8x32xf32> to vector<8xf32>
    %107 = vector.shape_cast %106 : vector<8xf32> to vector<8x1xf32>
    %cst_33 = arith.constant 3.200000e+01 : f32
    %108 = vector.broadcast %cst_33 : f32 to vector<8x1xf32>
    %109 = arith.divf %107, %108 : vector<8x1xf32>
    %110 = vector.broadcast %109 : vector<8x1xf32> to vector<8x32xf32>
    %111 = arith.subf %105, %110 : vector<8x32xf32>
    %112 = arith.mulf %111, %111 : vector<8x32xf32>
    %cst_34 = arith.constant dense<0.000000e+00> : vector<8xf32>
    %113 = vector.multi_reduction <add>, %112, %cst_34 [1] : vector<8x32xf32> to vector<8xf32>
    %114 = vector.shape_cast %113 : vector<8xf32> to vector<8x1xf32>
    %cst_35 = arith.constant 3.200000e+01 : f32
    %115 = vector.broadcast %cst_35 : f32 to vector<8x1xf32>
    %116 = arith.divf %114, %115 : vector<8x1xf32>
    %117 = vector.broadcast %109 : vector<8x1xf32> to vector<8x32xf32>
    %118 = arith.subf %105, %117 : vector<8x32xf32>
    %cst_36 = arith.constant 9.99999974E-6 : f32
    %119 = vector.broadcast %cst_36 : f32 to vector<8x1xf32>
    %120 = arith.addf %116, %119 : vector<8x1xf32>
    %121 = math.rsqrt %120 : vector<8x1xf32>
    %122 = vector.broadcast %121 : vector<8x1xf32> to vector<8x32xf32>
    %123 = arith.mulf %118, %122 : vector<8x32xf32>
    %c0_37 = arith.constant 0 : index
    %c0_38 = arith.constant 0 : index
    %124 = vector.load %arg10[%c0_37, %c0_38] : memref<1x32xf32, #tpu.memory_space<vmem>>, vector<1x32xf32>
    %125 = vector.broadcast %124 : vector<1x32xf32> to vector<8x32xf32>
    %126 = arith.mulf %123, %125 : vector<8x32xf32>
    %c0_39 = arith.constant 0 : index
    %c0_40 = arith.constant 0 : index
    %127 = vector.load %arg11[%c0_39, %c0_40] : memref<1x32xf32, #tpu.memory_space<vmem>>, vector<1x32xf32>
    %128 = vector.broadcast %127 : vector<1x32xf32> to vector<8x32xf32>
    %129 = arith.addf %126, %128 : vector<8x32xf32>
    %c0_41 = arith.constant 0 : index
    %c0_42 = arith.constant 0 : index
    %130 = vector.load %arg6[%c0_41, %c0_42] : memref<32x64xf32, #tpu.memory_space<vmem>>, vector<32x64xf32>
    %cst_43 = arith.constant dense<0.000000e+00> : vector<8x64xf32>
    %131 = tpu.matmul %129, %130, %cst_43 {dimension_numbers = #tpu.dot_dimension_numbers<[1], [0], [0], [1], [0, 0, 1, 1], [], []>} : vector<8x32xf32>, vector<32x64xf32>, vector<8x64xf32> -> vector<8x64xf32>
    %c0_44 = arith.constant 0 : index
    %c0_45 = arith.constant 0 : index
    %132 = vector.load %arg7[%c0_44, %c0_45] : memref<1x64xf32, #tpu.memory_space<vmem>>, vector<1x64xf32>
    %133 = vector.broadcast %132 : vector<1x64xf32> to vector<8x64xf32>
    %134 = arith.addf %131, %133 : vector<8x64xf32>
    %cst_46 = arith.constant 0.000000e+00 : f32
    %135 = vector.broadcast %cst_46 : f32 to vector<8x64xf32>
    %136 = arith.maximumf %134, %135 : vector<8x64xf32>
    %c0_47 = arith.constant 0 : index
    %c0_48 = arith.constant 0 : index
    %137 = vector.load %arg8[%c0_47, %c0_48] : memref<64x32xf32, #tpu.memory_space<vmem>>, vector<64x32xf32>
    %cst_49 = arith.constant dense<0.000000e+00> : vector<8x32xf32>
    %138 = tpu.matmul %136, %137, %cst_49 {dimension_numbers = #tpu.dot_dimension_numbers<[1], [0], [0], [1], [0, 0, 1, 1], [], []>} : vector<8x64xf32>, vector<64x32xf32>, vector<8x32xf32> -> vector<8x32xf32>
    %c0_50 = arith.constant 0 : index
    %c0_51 = arith.constant 0 : index
    %139 = vector.load %arg9[%c0_50, %c0_51] : memref<1x32xf32, #tpu.memory_space<vmem>>, vector<1x32xf32>
    %140 = vector.broadcast %139 : vector<1x32xf32> to vector<8x32xf32>
    %141 = arith.addf %138, %140 : vector<8x32xf32>
    %142 = arith.addf %129, %141 : vector<8x32xf32>
    %cst_52 = arith.constant dense<0.000000e+00> : vector<8xf32>
    %143 = vector.multi_reduction <add>, %142, %cst_52 [1] : vector<8x32xf32> to vector<8xf32>
    %144 = vector.shape_cast %143 : vector<8xf32> to vector<8x1xf32>
    %cst_53 = arith.constant 3.200000e+01 : f32
    %145 = vector.broadcast %cst_53 : f32 to vector<8x1xf32>
    %146 = arith.divf %144, %145 : vector<8x1xf32>
    %147 = vector.broadcast %146 : vector<8x1xf32> to vector<8x32xf32>
    %148 = arith.subf %142, %147 : vector<8x32xf32>
    %149 = arith.mulf %148, %148 : vector<8x32xf32>
    %cst_54 = arith.constant dense<0.000000e+00> : vector<8xf32>
    %150 = vector.multi_reduction <add>, %149, %cst_54 [1] : vector<8x32xf32> to vector<8xf32>
    %151 = vector.shape_cast %150 : vector<8xf32> to vector<8x1xf32>
    %cst_55 = arith.constant 3.200000e+01 : f32
    %152 = vector.broadcast %cst_55 : f32 to vector<8x1xf32>
    %153 = arith.divf %151, %152 : vector<8x1xf32>
    %154 = vector.broadcast %146 : vector<8x1xf32> to vector<8x32xf32>
    %155 = arith.subf %142, %154 : vector<8x32xf32>
    %cst_56 = arith.constant 9.99999974E-6 : f32
    %156 = vector.broadcast %cst_56 : f32 to vector<8x1xf32>
    %157 = arith.addf %153, %156 : vector<8x1xf32>
    %158 = math.rsqrt %157 : vector<8x1xf32>
    %159 = vector.broadcast %158 : vector<8x1xf32> to vector<8x32xf32>
    %160 = arith.mulf %155, %159 : vector<8x32xf32>
    %c0_57 = arith.constant 0 : index
    %c0_58 = arith.constant 0 : index
    %161 = vector.load %arg12[%c0_57, %c0_58] : memref<1x32xf32, #tpu.memory_space<vmem>>, vector<1x32xf32>
    %162 = vector.broadcast %161 : vector<1x32xf32> to vector<8x32xf32>
    %163 = arith.mulf %160, %162 : vector<8x32xf32>
    %c0_59 = arith.constant 0 : index
    %c0_60 = arith.constant 0 : index
    %164 = vector.load %arg13[%c0_59, %c0_60] : memref<1x32xf32, #tpu.memory_space<vmem>>, vector<1x32xf32>
    %165 = vector.broadcast %164 : vector<1x32xf32> to vector<8x32xf32>
    %166 = arith.addf %163, %165 : vector<8x32xf32>
    %167 = vector.shape_cast %166 : vector<8x32xf32> to vector<1x8x32xf32>
    %c0_61 = arith.constant 0 : index
    %c0_62 = arith.constant 0 : index
    %c0_63 = arith.constant 0 : index
    %168 = vector.load %arg14[%c0_61, %c0_62, %c0_63] : memref<1x8x32xf32, #tpu.memory_space<vmem>>, vector<1x8x32xf32>
    tpu.vector_store %arg14[%c0_61, %c0_62, %c0_63], %167 {strides = array<i32>} : memref<1x8x32xf32, #tpu.memory_space<vmem>>, vector<1x8x32xf32>,
    return
  }
  func.func @transform_0(%arg0: i32) -> (i32, i32, i32) {
    %c0_i32 = arith.constant 0 : i32
    %c0_i32_0 = arith.constant 0 : i32
    %c0_i32_1 = arith.constant 0 : i32
    return %arg0, %c0_i32, %c0_i32_0 : i32, i32, i32
  }
  func.func @transform_1(%arg0: i32) -> (i32, i32) {
    %c0_i32 = arith.constant 0 : i32
    %c0_i32_0 = arith.constant 0 : i32
    %c0_i32_1 = arith.constant 0 : i32
    return %c0_i32, %c0_i32_0 : i32, i32
  }
  func.func @transform_2(%arg0: i32) -> (i32, i32) {
    %c0_i32 = arith.constant 0 : i32
    %c0_i32_0 = arith.constant 0 : i32
    %c0_i32_1 = arith.constant 0 : i32
    return %c0_i32, %c0_i32_0 : i32, i32
  }
  func.func @transform_3(%arg0: i32) -> (i32, i32) {
    %c0_i32 = arith.constant 0 : i32
    %c0_i32_0 = arith.constant 0 : i32
    %c0_i32_1 = arith.constant 0 : i32
    return %c0_i32, %c0_i32_0 : i32, i32
  }
  func.func @transform_4(%arg0: i32) -> (i32, i32) {
    %c0_i32 = arith.constant 0 : i32
    %c0_i32_0 = arith.constant 0 : i32
    %c0_i32_1 = arith.constant 0 : i32
    return %c0_i32, %c0_i32_0 : i32, i32
  }
  func.func @transform_5(%arg0: i32) -> (i32, i32) {
    %c0_i32 = arith.constant 0 : i32
    %c0_i32_0 = arith.constant 0 : i32
    %c0_i32_1 = arith.constant 0 : i32
    return %c0_i32, %c0_i32_0 : i32, i32
  }
  func.func @transform_6(%arg0: i32) -> (i32, i32) {
    %c0_i32 = arith.constant 0 : i32
    %c0_i32_0 = arith.constant 0 : i32
    %c0_i32_1 = arith.constant 0 : i32
    return %c0_i32, %c0_i32_0 : i32, i32
  }
  func.func @transform_7(%arg0: i32) -> (i32, i32) {
    %c0_i32 = arith.constant 0 : i32
    %c0_i32_0 = arith.constant 0 : i32
    %c0_i32_1 = arith.constant 0 : i32
    return %c0_i32, %c0_i32_0 : i32, i32
  }
  func.func @transform_8(%arg0: i32) -> (i32, i32) {
    %c0_i32 = arith.constant 0 : i32
    %c0_i32_0 = arith.constant 0 : i32
    %c0_i32_1 = arith.constant 0 : i32
    return %c0_i32, %c0_i32_0 : i32, i32
  }
  func.func @transform_9(%arg0: i32) -> (i32, i32) {
    %c0_i32 = arith.constant 0 : i32
    %c0_i32_0 = arith.constant 0 : i32
    %c0_i32_1 = arith.constant 0 : i32
    return %c0_i32, %c0_i32_0 : i32, i32
  }
  func.func @transform_10(%arg0: i32) -> (i32, i32) {
    %c0_i32 = arith.constant 0 : i32
    %c0_i32_0 = arith.constant 0 : i32
    %c0_i32_1 = arith.constant 0 : i32
    return %c0_i32, %c0_i32_0 : i32, i32
  }
  func.func @transform_11(%arg0: i32) -> (i32, i32) {
    %c0_i32 = arith.constant 0 : i32
    %c0_i32_0 = arith.constant 0 : i32
    %c0_i32_1 = arith.constant 0 : i32
    return %c0_i32, %c0_i32_0 : i32, i32
  }
  func.func @transform_12(%arg0: i32) -> (i32, i32) {
    %c0_i32 = arith.constant 0 : i32
    %c0_i32_0 = arith.constant 0 : i32
    %c0_i32_1 = arith.constant 0 : i32
    return %c0_i32, %c0_i32_0 : i32, i32
  }
  func.func @transform_13(%arg0: i32) -> (i32, i32, i32) {
    %c0_i32 = arith.constant 0 : i32
    %c0_i32_0 = arith.constant 0 : i32
    %c0_i32_1 = arith.constant 0 : i32
    return %arg0, %c0_i32, %c0_i32_0 : i32, i32, i32
  }
}

</mosaic_0001>

<llo_original>
// kernel: tpu_custom_call.1
$region0: #{tpu_custom_call.1}
  #allocation0 [shape = 'u32[]', space=smem, size = 0x4, offset = 0x4, fixed_abs, tag = 'smem constant byte address 0x4 - core index']
  #allocation1 [shape = 'u32[144,128]{1,0:T(1,128)}', space=vmem, size = 0x12000, scoped, tag = 'internal scratch']
  %s0 = inlined_call_operand.hbm [shape: f32[2,8,32], index: 0, kind: input, shape index: {}]
  %s1 = inlined_call_operand.vmem [shape: f32[32,96], index: 1, kind: input, shape index: {}]
  %s2 = inlined_call_operand.vmem [shape: f32[1,96], index: 2, kind: input, shape index: {}]
  %s3 = inlined_call_operand.vmem [shape: f32[32,32], index: 3, kind: input, shape index: {}]
  %s4 = inlined_call_operand.vmem [shape: f32[1,32], index: 4, kind: input, shape index: {}]
  %s5 = inlined_call_operand.vmem [shape: f32[32,64], index: 5, kind: input, shape index: {}]
  %s6 = inlined_call_operand.vmem [shape: f32[1,64], index: 6, kind: input, shape index: {}]
  %s7 = inlined_call_operand.vmem [shape: f32[64,32], index: 7, kind: input, shape index: {}]
  %s8 = inlined_call_operand.vmem [shape: f32[1,32], index: 8, kind: input, shape index: {}]
  %s9 = inlined_call_operand.vmem [shape: f32[1,32], index: 9, kind: input, shape index: {}]
  %s10 = inlined_call_operand.vmem [shape: f32[1,32], index: 10, kind: input, shape index: {}]
  %s11 = inlined_call_operand.vmem [shape: f32[1,32], index: 11, kind: input, shape index: {}]
  %s12 = inlined_call_operand.vmem [shape: f32[1,32], index: 12, kind: input, shape index: {}]
  %s13 = inlined_call_operand.hbm [shape: f32[2,8,32], index: 13, kind: output, shape index: {}]
  %s14 = sld [smem:[#allocation0]]
  $region89: #{tpu_custom_call.1} parent=0
    _
  %s16 = ssub.s32 1, %s14
  %s17 = scalar_select 0, %s16, %s14
  $region1: #{tpu_custom_call.1} parent=0
    #allocation2 [shape = 'u8[8192]{0}', space=vmem, size = 0x2000, scoped, tag = 'input window, operand 0']
    #allocation3 [shape = 's32[2]{0}', space=sflag, size = 0x8, scoped, tag = 'scoped memory for tpu_custom_call.1']
    #allocation4 [shape = 's32[2]{0}', space=sflag, size = 0x8, scoped, tag = 'scoped memory for tpu_custom_call.1']
    #allocation5 [shape = 'u8[8192]{0}', space=vmem, size = 0x2000, scoped, tag = 'output window, operand 0']
    %18 = vsyncpa [#allocation3], 0
    %s19 = scalar_lea.sflag [#allocation3], 1
    %20 = vsyncpa %s19, 0
    %21 = vsyncpa [#allocation4], 0
    %s22 = scalar_lea.sflag [#allocation4], 1
    %23 = vsyncpa %s22, 0
    loop: start=0, step=1, limit=4
    $region2: #{tpu_custom_call.1} parent=1 // loop_pre_header
      _
    $region3: #{tpu_custom_call.1} parent=1 // loop_header
      %s25 = sphi 0, %s29
      %p26 = scmp.ge.s32.totalorder %s25, 4
      %s35 = sphi 0, %s37
      %s38 = sphi 0, %s35
      %s39 = sphi 0, %s38
      %s55 = sphi 0, %s39
      %s59 = sphi 0, %s59
      %s61 = sphi 0, %s59
      %s62 = sphi 0, %s61
      %s76 = sphi 0, %s62
      %s80 = sphi 0, %s80
      %s82 = sphi 0, %s80
      %s83 = sphi 0, %s82
      %s97 = sphi 0, %s83
      %s101 = sphi 0, %s101
      %s103 = sphi 0, %s101
      %s104 = sphi 0, %s103
      %s118 = sphi 0, %s104
      %s122 = sphi 0, %s122
      %s124 = sphi 0, %s122
      %s125 = sphi 0, %s124
      %s139 = sphi 0, %s125
      %s143 = sphi 0, %s143
      %s145 = sphi 0, %s143
      %s146 = sphi 0, %s145
      %s160 = sphi 0, %s146
      %s164 = sphi 0, %s164
      %s166 = sphi 0, %s164
      %s167 = sphi 0, %s166
      %s181 = sphi 0, %s167
      %s185 = sphi 0, %s185
      %s187 = sphi 0, %s185
      %s188 = sphi 0, %s187
      %s202 = sphi 0, %s188
      %s206 = sphi 0, %s206
      %s208 = sphi 0, %s206
      %s209 = sphi 0, %s208
      %s223 = sphi 0, %s209
      %s227 = sphi 0, %s227
      %s229 = sphi 0, %s227
      %s230 = sphi 0, %s229
      %s244 = sphi 0, %s230
      %s248 = sphi 0, %s248
      %s250 = sphi 0, %s248
      %s251 = sphi 0, %s250
      %s265 = sphi 0, %s251
      %s269 = sphi 0, %s269
      %s271 = sphi 0, %s269
      %s272 = sphi 0, %s271
      %s286 = sphi 0, %s272
      %s290 = sphi 0, %s290
      %s292 = sphi 0, %s290
      %s293 = sphi 0, %s292
      %s307 = sphi 0, %s293
      %s313 = sphi 0, %s315
      %s316 = sphi 0, %s313
      %s317 = sphi 0, %s316
      %s333 = sphi 0, %s317
    $region4: #{tpu_custom_call.1} parent=1 // loop_header_branch
      %28 = sbr.rel (%p26) target = $region8
    $region5: #{tpu_custom_call.1} parent=1 // loop_body
      %s30 = ssub.s32 %s25, 1
      %s31 = ssub.s32 %s25, 2
      %s32 = sadd.s32 %s25, 1
      %s33 = ssub.s32 %s25, %s32
      %p34 = scmp.eq.s32.totalorder %s33, 0
      %s36 = sadd.s32 %s35, 1
      %s37 = scalar_select %p34, %s35, %s36
      %p40 = pneg %p34
      %p41 = scmp.eq.s32.totalorder %s25, 1
      %p42 = por %p40, %p41
      %p43 = scmp.ne.s32.totalorder %s35, %s38
      %p44 = scmp.eq.s32.totalorder %s25, 0
      %p45 = por %p43, %p44
      %p46 = scmp.ne.s32.totalorder %s35, %s38
      %p47 = scmp.eq.s32.totalorder %s30, 1
      %p48 = por %p46, %p47
      %p49 = scmp.ne.s32.totalorder %s38, %s39
      %p50 = scmp.eq.s32.totalorder %s30, 0
      %p51 = por %p49, %p50
      %p52 = scmp.ne.s32.totalorder %s38, %s39
      %p53 = scmp.eq.s32.totalorder %s31, 1
      %p54 = por %p52, %p53
      %p56 = scmp.ne.s32.totalorder %s39, %s55
      %p57 = scmp.eq.s32.totalorder %s31, 0
      %p58 = por %p56, %p57
      %s60 = sadd.s32 %s59, 1
      %p63 = scmp.eq.s32.totalorder %s25, 1
      %p64 = scmp.ne.s32.totalorder %s59, %s61
      %p65 = scmp.eq.s32.totalorder %s25, 0
      %p66 = por %p64, %p65
      %p67 = scmp.ne.s32.totalorder %s59, %s61
      %p68 = scmp.eq.s32.totalorder %s30, 1
      %p69 = por %p67, %p68
      %p70 = scmp.ne.s32.totalorder %s61, %s62
      %p71 = scmp.eq.s32.totalorder %s30, 0
      %p72 = por %p70, %p71
      %p73 = scmp.ne.s32.totalorder %s61, %s62
      %p74 = scmp.eq.s32.totalorder %s31, 1
      %p75 = por %p73, %p74
      %p77 = scmp.ne.s32.totalorder %s62, %s76
      %p78 = scmp.eq.s32.totalorder %s31, 0
      %p79 = por %p77, %p78
      %s81 = sadd.s32 %s80, 1
      %p84 = scmp.eq.s32.totalorder %s25, 1
      %p85 = scmp.ne.s32.totalorder %s80, %s82
      %p86 = scmp.eq.s32.totalorder %s25, 0
      %p87 = por %p85, %p86
      %p88 = scmp.ne.s32.totalorder %s80, %s82
      %p89 = scmp.eq.s32.totalorder %s30, 1
      %p90 = por %p88, %p89
      %p91 = scmp.ne.s32.totalorder %s82, %s83
      %p92 = scmp.eq.s32.totalorder %s30, 0
      %p93 = por %p91, %p92
      %p94 = scmp.ne.s32.totalorder %s82, %s83
      %p95 = scmp.eq.s32.totalorder %s31, 1
      %p96 = por %p94, %p95
      %p98 = scmp.ne.s32.totalorder %s83, %s97
      %p99 = scmp.eq.s32.totalorder %s31, 0
      %p100 = por %p98, %p99
      %s102 = sadd.s32 %s101, 1
      %p105 = scmp.eq.s32.totalorder %s25, 1
      %p106 = scmp.ne.s32.totalorder %s101, %s103
      %p107 = scmp.eq.s32.totalorder %s25, 0
      %p108 = por %p106, %p107
      %p109 = scmp.ne.s32.totalorder %s101, %s103
      %p110 = scmp.eq.s32.totalorder %s30, 1
      %p111 = por %p109, %p110
      %p112 = scmp.ne.s32.totalorder %s103, %s104
      %p113 = scmp.eq.s32.totalorder %s30, 0
      %p114 = por %p112, %p113
      %p115 = scmp.ne.s32.totalorder %s103, %s104
      %p116 = scmp.eq.s32.totalorder %s31, 1
      %p117 = por %p115, %p116
      %p119 = scmp.ne.s32.totalorder %s104, %s118
      %p120 = scmp.eq.s32.totalorder %s31, 0
      %p121 = por %p119, %p120
      %s123 = sadd.s32 %s122, 1
      %p126 = scmp.eq.s32.totalorder %s25, 1
      %p127 = scmp.ne.s32.totalorder %s122, %s124
      %p128 = scmp.eq.s32.totalorder %s25, 0
      %p129 = por %p127, %p128
      %p130 = scmp.ne.s32.totalorder %s122, %s124
      %p131 = scmp.eq.s32.totalorder %s30, 1
      %p132 = por %p130, %p131
      %p133 = scmp.ne.s32.totalorder %s124, %s125
      %p134 = scmp.eq.s32.totalorder %s30, 0
      %p135 = por %p133, %p134
      %p136 = scmp.ne.s32.totalorder %s124, %s125
      %p137 = scmp.eq.s32.totalorder %s31, 1
      %p138 = por %p136, %p137
      %p140 = scmp.ne.s32.totalorder %s125, %s139
      %p141 = scmp.eq.s32.totalorder %s31, 0
      %p142 = por %p140, %p141
      %s144 = sadd.s32 %s143, 1
      %p147 = scmp.eq.s32.totalorder %s25, 1
      %p148 = scmp.ne.s32.totalorder %s143, %s145
      %p149 = scmp.eq.s32.totalorder %s25, 0
      %p150 = por %p148, %p149
      %p151 = scmp.ne.s32.totalorder %s143, %s145
      %p152 = scmp.eq.s32.totalorder %s30, 1
      %p153 = por %p151, %p152
      %p154 = scmp.ne.s32.totalorder %s145, %s146
      %p155 = scmp.eq.s32.totalorder %s30, 0
      %p156 = por %p154, %p155
      %p157 = scmp.ne.s32.totalorder %s145, %s146
      %p158 = scmp.eq.s32.totalorder %s31, 1
      %p159 = por %p157, %p158
      %p161 = scmp.ne.s32.totalorder %s146, %s160
      %p162 = scmp.eq.s32.totalorder %s31, 0
      %p163 = por %p161, %p162
      %s165 = sadd.s32 %s164, 1
      %p168 = scmp.eq.s32.totalorder %s25, 1
      %p169 = scmp.ne.s32.totalorder %s164, %s166
      %p170 = scmp.eq.s32.totalorder %s25, 0
      %p171 = por %p169, %p170
      %p172 = scmp.ne.s32.totalorder %s164, %s166
      %p173 = scmp.eq.s32.totalorder %s30, 1
      %p174 = por %p172, %p173
      %p175 = scmp.ne.s32.totalorder %s166, %s167
      %p176 = scmp.eq.s32.totalorder %s30, 0
      %p177 = por %p175, %p176
      %p178 = scmp.ne.s32.totalorder %s166, %s167
      %p179 = scmp.eq.s32.totalorder %s31, 1
      %p180 = por %p178, %p179
      %p182 = scmp.ne.s32.totalorder %s167, %s181
      %p183 = scmp.eq.s32.totalorder %s31, 0
      %p184 = por %p182, %p183
      %s186 = sadd.s32 %s185, 1
      %p189 = scmp.eq.s32.totalorder %s25, 1
      %p190 = scmp.ne.s32.totalorder %s185, %s187
      %p191 = scmp.eq.s32.totalorder %s25, 0
      %p192 = por %p190, %p191
      %p193 = scmp.ne.s32.totalorder %s185, %s187
      %p194 = scmp.eq.s32.totalorder %s30, 1
      %p195 = por %p193, %p194
      %p196 = scmp.ne.s32.totalorder %s187, %s188
      %p197 = scmp.eq.s32.totalorder %s30, 0
      %p198 = por %p196, %p197
      %p199 = scmp.ne.s32.totalorder %s187, %s188
      %p200 = scmp.eq.s32.totalorder %s31, 1
      %p201 = por %p199, %p200
      %p203 = scmp.ne.s32.totalorder %s188, %s202
      %p204 = scmp.eq.s32.totalorder %s31, 0
      %p205 = por %p203, %p204
      %s207 = sadd.s32 %s206, 1
      %p210 = scmp.eq.s32.totalorder %s25, 1
      %p211 = scmp.ne.s32.totalorder %s206, %s208
      %p212 = scmp.eq.s32.totalorder %s25, 0
      %p213 = por %p211, %p212
      %p214 = scmp.ne.s32.totalorder %s206, %s208
      %p215 = scmp.eq.s32.totalorder %s30, 1
      %p216 = por %p214, %p215
      %p217 = scmp.ne.s32.totalorder %s208, %s209
      %p218 = scmp.eq.s32.totalorder %s30, 0
      %p219 = por %p217, %p218
      %p220 = scmp.ne.s32.totalorder %s208, %s209
      %p221 = scmp.eq.s32.totalorder %s31, 1
      %p222 = por %p220, %p221
      %p224 = scmp.ne.s32.totalorder %s209, %s223
      %p225 = scmp.eq.s32.totalorder %s31, 0
      %p226 = por %p224, %p225
      %s228 = sadd.s32 %s227, 1
      %p231 = scmp.eq.s32.totalorder %s25, 1
      %p232 = scmp.ne.s32.totalorder %s227, %s229
      %p233 = scmp.eq.s32.totalorder %s25, 0
      %p234 = por %p232, %p233
      %p235 = scmp.ne.s32.totalorder %s227, %s229
      %p236 = scmp.eq.s32.totalorder %s30, 1
      %p237 = por %p235, %p236
      %p238 = scmp.ne.s32.totalorder %s229, %s230
      %p239 = scmp.eq.s32.totalorder %s30, 0
      %p240 = por %p238, %p239
      %p241 = scmp.ne.s32.totalorder %s229, %s230
      %p242 = scmp.eq.s32.totalorder %s31, 1
      %p243 = por %p241, %p242
      %p245 = scmp.ne.s32.totalorder %s230, %s244
      %p246 = scmp.eq.s32.totalorder %s31, 0
      %p247 = por %p245, %p246
      %s249 = sadd.s32 %s248, 1
      %p252 = scmp.eq.s32.totalorder %s25, 1
      %p253 = scmp.ne.s32.totalorder %s248, %s250
      %p254 = scmp.eq.s32.totalorder %s25, 0
      %p255 = por %p253, %p254
      %p256 = scmp.ne.s32.totalorder %s248, %s250
      %p257 = scmp.eq.s32.totalorder %s30, 1
      %p258 = por %p256, %p257
      %p259 = scmp.ne.s32.totalorder %s250, %s251
      %p260 = scmp.eq.s32.totalorder %s30, 0
      %p261 = por %p259, %p260
      %p262 = scmp.ne.s32.totalorder %s250, %s251
      %p263 = scmp.eq.s32.totalorder %s31, 1
      %p264 = por %p262, %p263
      %p266 = scmp.ne.s32.totalorder %s251, %s265
      %p267 = scmp.eq.s32.totalorder %s31, 0
      %p268 = por %p266, %p267
      %s270 = sadd.s32 %s269, 1
      %p273 = scmp.eq.s32.totalorder %s25, 1
      %p274 = scmp.ne.s32.totalorder %s269, %s271
      %p275 = scmp.eq.s32.totalorder %s25, 0
      %p276 = por %p274, %p275
      %p277 = scmp.ne.s32.totalorder %s269, %s271
      %p278 = scmp.eq.s32.totalorder %s30, 1
      %p279 = por %p277, %p278
      %p280 = scmp.ne.s32.totalorder %s271, %s272
      %p281 = scmp.eq.s32.totalorder %s30, 0
      %p282 = por %p280, %p281
      %p283 = scmp.ne.s32.totalorder %s271, %s272
      %p284 = scmp.eq.s32.totalorder %s31, 1
      %p285 = por %p283, %p284
      %p287 = scmp.ne.s32.totalorder %s272, %s286
      %p288 = scmp.eq.s32.totalorder %s31, 0
      %p289 = por %p287, %p288
      %s291 = sadd.s32 %s290, 1
      %p294 = scmp.eq.s32.totalorder %s25, 1
      %p295 = scmp.ne.s32.totalorder %s290, %s292
      %p296 = scmp.eq.s32.totalorder %s25, 0
      %p297 = por %p295, %p296
      %p298 = scmp.ne.s32.totalorder %s290, %s292
      %p299 = scmp.eq.s32.totalorder %s30, 1
      %p300 = por %p298, %p299
      %p301 = scmp.ne.s32.totalorder %s292, %s293
      %p302 = scmp.eq.s32.totalorder %s30, 0
      %p303 = por %p301, %p302
      %p304 = scmp.ne.s32.totalorder %s292, %s293
      %p305 = scmp.eq.s32.totalorder %s31, 1
      %p306 = por %p304, %p305
      %p308 = scmp.ne.s32.totalorder %s293, %s307
      %p309 = scmp.eq.s32.totalorder %s31, 0
      %p310 = por %p308, %p309
      %s311 = ssub.s32 %s25, %s32
      %p312 = scmp.eq.s32.totalorder %s311, 0
      %s314 = sadd.s32 %s313, 1
      %s315 = scalar_select %p312, %s313, %s314
      %p318 = pneg %p312
      %p319 = scmp.eq.s32.totalorder %s25, 1
      %p320 = por %p318, %p319
      %p321 = scmp.ne.s32.totalorder %s313, %s316
      %p322 = scmp.eq.s32.totalorder %s25, 0
      %p323 = por %p321, %p322
      %p324 = scmp.ne.s32.totalorder %s313, %s316
      %p325 = scmp.eq.s32.totalorder %s30, 1
      %p326 = por %p324, %p325
      %p327 = scmp.ne.s32.totalorder %s316, %s317
      %p328 = scmp.eq.s32.totalorder %s30, 0
      %p329 = por %p327, %p328
      %p330 = scmp.ne.s32.totalorder %s316, %s317
      %p331 = scmp.eq.s32.totalorder %s31, 1
      %p332 = por %p330, %p331
      %p334 = scmp.ne.s32.totalorder %s317, %s333
      %p335 = scmp.eq.s32.totalorder %s31, 0
      %p336 = por %p334, %p335
      %p337 = scmp.le.s32.totalorder 1, %s25
      %p338 = scmp.lt.s32.totalorder %s25, 3
      %p339 = pnand %p337, %p338
      %p340 = pneg %p339
      // Predicated region
      $region9: #{tpu_custom_call.1} parent=5 // pred_check
        _
      $region10: #{tpu_custom_call.1} parent=5 // pred_check_branch
        %342 = sbr.rel (%p339) target = $region12
      $region11: #{tpu_custom_call.1} parent=5 // pred_region
        %s343 = ssub.s32 %s25, 1
        // Predicated region
        $region13: #{tpu_custom_call.1} parent=11 // pred_check
          %p344 = pneg %p72
        $region14: #{tpu_custom_call.1} parent=11 // pred_check_branch
          %346 = sbr.rel (%p344) target = $region16
        $region15: #{tpu_custom_call.1} parent=11 // pred_region
          _
        $region16: #{tpu_custom_call.1} parent=11 // pred_fallthru
          _
        // Predicated region
        $region17: #{tpu_custom_call.1} parent=11 // pred_check
          %p347 = pneg %p93
        $region18: #{tpu_custom_call.1} parent=11 // pred_check_branch
          %349 = sbr.rel (%p347) target = $region20
        $region19: #{tpu_custom_call.1} parent=11 // pred_region
          _
        $region20: #{tpu_custom_call.1} parent=11 // pred_fallthru
          _
        // Predicated region
        $region21: #{tpu_custom_call.1} parent=11 // pred_check
          %p350 = pneg %p114
        $region22: #{tpu_custom_call.1} parent=11 // pred_check_branch
          %352 = sbr.rel (%p350) target = $region24
        $region23: #{tpu_custom_call.1} parent=11 // pred_region
          _
        $region24: #{tpu_custom_call.1} parent=11 // pred_fallthru
          _
        // Predicated region
        $region25: #{tpu_custom_call.1} parent=11 // pred_check
          %p353 = pneg %p135
        $region26: #{tpu_custom_call.1} parent=11 // pred_check_branch
          %355 = sbr.rel (%p353) target = $region28
        $region27: #{tpu_custom_call.1} parent=11 // pred_region
          _
        $region28: #{tpu_custom_call.1} parent=11 // pred_fallthru
          _
        // Predicated region
        $region29: #{tpu_custom_call.1} parent=11 // pred_check
          %p356 = pneg %p156
        $region30: #{tpu_custom_call.1} parent=11 // pred_check_branch
          %358 = sbr.rel (%p356) target = $region32
        $region31: #{tpu_custom_call.1} parent=11 // pred_region
          _
        $region32: #{tpu_custom_call.1} parent=11 // pred_fallthru
          _
        // Predicated region
        $region33: #{tpu_custom_call.1} parent=11 // pred_check
          %p359 = pneg %p177
        $region34: #{tpu_custom_call.1} parent=11 // pred_check_branch
          %361 = sbr.rel (%p359) target = $region36
        $region35: #{tpu_custom_call.1} parent=11 // pred_region
          _
        $region36: #{tpu_custom_call.1} parent=11 // pred_fallthru
          _
        // Predicated region
        $region37: #{tpu_custom_call.1} parent=11 // pred_check
          %p362 = pneg %p198
        $region38: #{tpu_custom_call.1} parent=11 // pred_check_branch
          %364 = sbr.rel (%p362) target = $region40
        $region39: #{tpu_custom_call.1} parent=11 // pred_region
          _
        $region40: #{tpu_custom_call.1} parent=11 // pred_fallthru
          _
        // Predicated region
        $region41: #{tpu_custom_call.1} parent=11 // pred_check
          %p365 = pneg %p219
        $region42: #{tpu_custom_call.1} parent=11 // pred_check_branch
          %367 = sbr.rel (%p365) target = $region44
        $region43: #{tpu_custom_call.1} parent=11 // pred_region
          _
        $region44: #{tpu_custom_call.1} parent=11 // pred_fallthru
          _
        // Predicated region
        $region45: #{tpu_custom_call.1} parent=11 // pred_check
          %p368 = pneg %p240
        $region46: #{tpu_custom_call.1} parent=11 // pred_check_branch
          %370 = sbr.rel (%p368) target = $region48
        $region47: #{tpu_custom_call.1} parent=11 // pred_region
          _
        $region48: #{tpu_custom_call.1} parent=11 // pred_fallthru
          _
        // Predicated region
        $region49: #{tpu_custom_call.1} parent=11 // pred_check
          %p371 = pneg %p261
        $region50: #{tpu_custom_call.1} parent=11 // pred_check_branch
          %373 = sbr.rel (%p371) target = $region52
        $region51: #{tpu_custom_call.1} parent=11 // pred_region
          _
        $region52: #{tpu_custom_call.1} parent=11 // pred_fallthru
          _
        // Predicated region
        $region53: #{tpu_custom_call.1} parent=11 // pred_check
          %p374 = pneg %p282
        $region54: #{tpu_custom_call.1} parent=11 // pred_check_branch
          %376 = sbr.rel (%p374) target = $region56
        $region55: #{tpu_custom_call.1} parent=11 // pred_region
          _
        $region56: #{tpu_custom_call.1} parent=11 // pred_fallthru
          _
        // Predicated region
        $region57: #{tpu_custom_call.1} parent=11 // pred_check
          %p377 = pneg %p303
        $region58: #{tpu_custom_call.1} parent=11 // pred_check_branch
          %379 = sbr.rel (%p377) target = $region60
        $region59: #{tpu_custom_call.1} parent=11 // pred_region
          _
        $region60: #{tpu_custom_call.1} parent=11 // pred_fallthru
          _
      $region12: #{tpu_custom_call.1} parent=5 // pred_fallthru
        _
      %p380 = scmp.lt.s32.totalorder %s25, 2
      // Predicated region
      $region61: #{tpu_custom_call.1} parent=5 // pred_check
        %p381 = pneg %p380
      $region62: #{tpu_custom_call.1} parent=5 // pred_check_branch
        %383 = sbr.rel (%p381) target = $region64
      $region63: #{tpu_custom_call.1} parent=5 // pred_region
        // Predicated region
        $region65: #{tpu_custom_call.1} parent=63 // pred_check
          %p384 = pneg %p45
        $region66: #{tpu_custom_call.1} parent=63 // pred_check_branch
          %386 = sbr.rel (%p384) target = $region68
        $region67: #{tpu_custom_call.1} parent=63 // pred_region
          %s387 = sand.u32 %s35, 1
          %s388 = scalar_lea.sflag [#allocation3], %s387
          %s389 = sand.u32 %s35, 1
          %s390 = smul.addr %s389, 8
          %s391 = scalar_lea.vmem [#allocation2], %s390
          %s393 = ssub.s32 128, 128
          %394 = vsyncadd %s388, %s393
          %s395 = smul.addr %s25, 128
          %s396 = scalar_lea.hbm %s0, %s395
          %s398 = sshll.u32 %s391, 4
          %s399 = int_to_ptr.vmem [resolvable:$true] %s398
          %401 = dma.hbm_to_vmem [thread:$0]  %s396, 128, %s399, %s388
        $region68: #{tpu_custom_call.1} parent=63 // pred_fallthru
          _
      $region64: #{tpu_custom_call.1} parent=5 // pred_fallthru
        _
      %p402 = scmp.le.s32.totalorder 1, %s25
      %p403 = scmp.lt.s32.totalorder %s25, 3
      %p404 = pnand %p402, %p403
      %p405 = pneg %p404
      // Predicated region
      $region69: #{tpu_custom_call.1} parent=5 // pred_check
        _
      $region70: #{tpu_custom_call.1} parent=5 // pred_check_branch
        %407 = sbr.rel (%p404) target = $region72
      $region71: #{tpu_custom_call.1} parent=5 // pred_region
        %s408 = ssub.s32 %s25, 1
        %s409 = sand.u32 %s38, 1
        %s410 = scalar_lea.sflag [#allocation3], %s409
        %s411 = sand.u32 %s38, 1
        %s412 = smul.addr %s411, 8
        %s413 = scalar_lea.vmem [#allocation2], %s412
        // Predicated region
        $region73: #{tpu_custom_call.1} parent=71 // pred_check
          %p414 = pneg %p51
        $region74: #{tpu_custom_call.1} parent=71 // pred_check_branch
          %416 = sbr.rel (%p414) target = $region76
        $region75: #{tpu_custom_call.1} parent=71 // pred_region
          %417 = dma.done %s410, 128
        $region76: #{tpu_custom_call.1} parent=71 // pred_fallthru
          _
        %s418 = sand.u32 %s38, 1
        %s419 = scalar_lea.sflag [#allocation3], %s418
        %s420 = sand.u32 %s38, 1
        %s421 = smul.addr %s420, 8
        %s422 = scalar_lea.vmem [#allocation2], %s421
        %p423 = pneg %p51
        %p424 = pneg %p48
        %p425 = pneg %p72
        %p426 = pneg %p69
        %p427 = pneg %p93
        %p428 = pneg %p90
        %p429 = pneg %p114
        %p430 = pneg %p111
        %p431 = pneg %p135
        %p432 = pneg %p132
        %p433 = pneg %p156
        %p434 = pneg %p153
        %p435 = pneg %p177
        %p436 = pneg %p174
        %p437 = pneg %p198
        %p438 = pneg %p195
        %p439 = pneg %p219
        %p440 = pneg %p216
        %p441 = pneg %p240
        %p442 = pneg %p237
        %p443 = pneg %p261
        %p444 = pneg %p258
        %p445 = pneg %p282
        %p446 = pneg %p279
        %p447 = pneg %p303
        %p448 = pneg %p300
        %p449 = pneg %p329
        %p450 = pneg %p326
        %s451 = sand.u32 %s316, 1
        %s452 = scalar_lea.sflag [#allocation4], %s451
        %s453 = sand.u32 %s316, 1
        %s454 = smul.addr %s453, 8
        %s455 = scalar_lea.vmem [#allocation5], %s454
        %v456 = vld [vmem:[%s413] sm:$0xff]
        %v457 = vld [vmem:[%s1] sm:$0xff]
        %v458 = vld [vmem:[%s1 + $0x8] sm:$0xff]
        %v459 = vld [vmem:[%s1 + $0x10] sm:$0xff]
        %v460 = vld [vmem:[%s1 + $0x18] sm:$0xff]
        %v461 = vld [vmem:[%s2] sm:$0x1]
        %v463 = vlaneseq
        %v464 = vshrl.u32 %v463, 7
        %v465 = vsub.s32 0, %v464
        %v466 = vrot.slane %v461, %v465
        %vm468 = vcmask 261120
        %v470 = vsel %vm468, %v456, 0
        %472 = vmatprep.subr.mxu0 0.0
        %473 = vmatpush1.msra.mxu0 %v457
        %474 = vmatprep.subr.mxu0 0.0
        %475 = vmatpush1.msra.mxu0 %v458
        %476 = vmatprep.subr.mxu0 0.0
        %477 = vmatpush1.msra.mxu0 %v459
        %478 = vmatprep.subr.mxu0 0.0
        %479 = vmatpush1.msra.mxu0 %v460
        %480 = vmatprep.subr.mxu0 0.0
        %481 = vmatpush1.msra.mxu0 0.0
        %482 = vmatprep.subr.mxu0 0.0
        %483 = vmatpush1.msra.mxu0 0.0
        %484 = vmatprep.subr.mxu0 0.0
        %485 = vmatpush1.msra.mxu0 0.0
        %486 = vmatprep.subr.mxu0 0.0
        %487 = vmatpush1.msra.mxu0 0.0
        %488 = vmatprep.subr.mxu0 0.0
        %489 = vmatpush1.msra.mxu0 0.0
        %490 = vmatprep.subr.mxu0 0.0
        %491 = vmatpush1.msra.mxu0 0.0
        %492 = vmatprep.subr.mxu0 0.0
        %493 = vmatpush1.msra.mxu0 0.0
        %494 = vmatprep.subr.mxu0 0.0
        %495 = vmatpush1.msra.mxu0 0.0
        %496 = vmatprep.subr.mxu0 0.0
        %497 = vmatpush1.msra.mxu0 0.0
        %498 = vmatprep.subr.mxu0 0.0
        %499 = vmatpush1.msra.mxu0 0.0
        %500 = vmatprep.subr.mxu0 0.0
        %501 = vmatpush1.msra.mxu0 0.0
        %502 = vmatprep.subr.mxu0 0.0
        %503 = vmatpush1.msra.mxu0 0.0
        %504 = vmatprep.subr.mxu0 0.0
        %505 = vmatpush1.msra.mxu0 0.0
        %506 = vmatprep.subr.mxu0 0.0
        %507 = vmatpush1.msra.mxu0 0.0
        %508 = vmatprep.subr.mxu0 0.0
        %509 = vmatpush1.msra.mxu0 0.0
        %510 = vmatprep.subr.mxu0 0.0
        %511 = vmatpush1.msra.mxu0 0.0
        %512 = vmatprep.subr.mxu0 0.0
        %513 = vmatpush1.msra.mxu0 0.0
        %514 = vmatprep.subr.mxu0 0.0
        %515 = vmatpush1.msra.mxu0 0.0
        %516 = vmatprep.subr.mxu0 0.0
        %517 = vmatpush1.msra.mxu0 0.0
        %518 = vmatprep.subr.mxu0 0.0
        %519 = vmatpush1.msra.mxu0 0.0
        %520 = vmatprep.subr.mxu0 0.0
        %521 = vmatpush1.msra.mxu0 0.0
        %522 = vmatprep.subr.mxu0 0.0
        %523 = vmatpush1.msra.mxu0 0.0
        %524 = vmatprep.subr.mxu0 0.0
        %525 = vmatpush1.msra.mxu0 0.0
        %526 = vmatprep.subr.mxu0 0.0
        %527 = vmatpush1.msra.mxu0 0.0
        %528 = vmatprep.subr.mxu0 0.0
        %529 = vmatpush1.msra.mxu0 0.0
        %530 = vmatprep.subr.mxu0 0.0
        %531 = vmatpush1.msra.mxu0 0.0
        %532 = vmatprep.subr.mxu0 0.0
        %533 = vmatpush1.msra.mxu0 0.0
        %534 = vmatprep.subr.mxu0 0.0
        %535 = vmatpush1.msra.mxu0 0.0
        %536 = vmatprep.mubr.f32.mxu0 0.0
        %537 = vmatmul.mubr.f32.gmra.mrb[0].mxu0 %v470
        %v538 = vpop.f32.mrb[0].mxu0
        %v539 = vadd.f32 %v466, %v538
        %v540 = vpop.f32.mrb[0].mxu0
        %541 = vdwg.mxu0
        %v542 = vmul.f32 %v539, 0.35355338
        %v543 = vld [vmem:[%s3] sm:$0xff]
        %v544 = vld [vmem:[%s3 + $0x8] sm:$0xff]
        %v545 = vld [vmem:[%s3 + $0x10] sm:$0xff]
        %v546 = vld [vmem:[%s3 + $0x18] sm:$0xff]
        %548 = vrot.lane.b32.xlu0 %v539, 96
        %v549 = vpop.permute.xlu0 %548
        %vm550 = vcmask 64512
        %v552 = vsel %vm550, %v542, 0
        %v554 = vsel %vm550, %v549, 0
        %556 = vmatprep.subr.mxu0 0.0
        %557 = vmatpush1.xpose.msra.mxu0 %v554
        %558 = vmatprep.subr.mxu0 0.0
        %559 = vmatpush1.xpose.msra.mxu0 0.0
        %560 = vmatprep.subr.mxu0 0.0
        %561 = vmatpush1.xpose.msra.mxu0 0.0
        %562 = vmatprep.subr.mxu0 0.0
        %563 = vmatpush1.xpose.msra.mxu0 0.0
        %564 = vmatprep.subr.mxu0 0.0
        %565 = vmatpush1.xpose.msra.mxu0 0.0
        %566 = vmatprep.subr.mxu0 0.0
        %567 = vmatpush1.xpose.msra.mxu0 0.0
        %568 = vmatprep.subr.mxu0 0.0
        %569 = vmatpush1.xpose.msra.mxu0 0.0
        %570 = vmatprep.subr.mxu0 0.0
        %571 = vmatpush1.xpose.msra.mxu0 0.0
        %572 = vmatprep.subr.mxu0 0.0
        %573 = vmatpush1.xpose.msra.mxu0 0.0
        %574 = vmatprep.subr.mxu0 0.0
        %575 = vmatpush1.xpose.msra.mxu0 0.0
        %576 = vmatprep.subr.mxu0 0.0
        %577 = vmatpush1.xpose.msra.mxu0 0.0
        %578 = vmatprep.subr.mxu0 0.0
        %579 = vmatpush1.xpose.msra.mxu0 0.0
        %580 = vmatprep.subr.mxu0 0.0
        %581 = vmatpush1.xpose.msra.mxu0 0.0
        %582 = vmatprep.subr.mxu0 0.0
        %583 = vmatpush1.xpose.msra.mxu0 0.0
        %584 = vmatprep.subr.mxu0 0.0
        %585 = vmatpush1.xpose.msra.mxu0 0.0
        %586 = vmatprep.subr.mxu0 0.0
        %587 = vmatpush1.xpose.msra.mxu0 0.0
        %588 = vmatprep.subr.mxu0 0.0
        %589 = vmatpush1.xpose.msra.mxu0 0.0
        %590 = vmatprep.subr.mxu0 0.0
        %591 = vmatpush1.xpose.msra.mxu0 0.0
        %592 = vmatprep.subr.mxu0 0.0
        %593 = vmatpush1.xpose.msra.mxu0 0.0
        %594 = vmatprep.subr.mxu0 0.0
        %595 = vmatpush1.xpose.msra.mxu0 0.0
        %596 = vmatprep.subr.mxu0 0.0
        %597 = vmatpush1.xpose.msra.mxu0 0.0
        %598 = vmatprep.subr.mxu0 0.0
        %599 = vmatpush1.xpose.msra.mxu0 0.0
        %600 = vmatprep.subr.mxu0 0.0
        %601 = vmatpush1.xpose.msra.mxu0 0.0
        %602 = vmatprep.subr.mxu0 0.0
        %603 = vmatpush1.xpose.msra.mxu0 0.0
        %604 = vmatprep.subr.mxu0 0.0
        %605 = vmatpush1.xpose.msra.mxu0 0.0
        %606 = vmatprep.subr.mxu0 0.0
        %607 = vmatpush1.xpose.msra.mxu0 0.0
        %608 = vmatprep.subr.mxu0 0.0
        %609 = vmatpush1.xpose.msra.mxu0 0.0
        %610 = vmatprep.subr.mxu0 0.0
        %611 = vmatpush1.xpose.msra.mxu0 0.0
        %612 = vmatprep.subr.mxu0 0.0
        %613 = vmatpush1.xpose.msra.mxu0 0.0
        %614 = vmatprep.subr.mxu0 0.0
        %615 = vmatpush1.xpose.msra.mxu0 0.0
        %616 = vmatprep.subr.mxu0 0.0
        %617 = vmatpush1.xpose.msra.mxu0 0.0
        %618 = vmatprep.subr.mxu0 0.0
        %619 = vmatpush1.xpose.msra.mxu0 0.0
        %620 = vmatprep.mubr.f32.mxu0 0.0
        %621 = vmatmul.mubr.f32.gmra.mrb[0].mxu0 %v552
        %v622 = vpop.f32.mrb[0].mxu0
        %v623 = vadd.f32 0.0, %v622
        %v624 = vpop.f32.mrb[0].mxu0
        %625 = vdwg.mxu0
        %v626 = vsel %vm550, %v623, -inf
        %627 = vmax.xlane.f32.xlu0 %v626
        %v628 = vpop.xlane.xlu0 %627
        %v629 = vsub.f32 %v623, %v628
        %v630 = vmul.f32 %v629, 1.442695
        %v631 = vpow.pop %v630
        %v632 = vsel %vm550, %v631, 0.0
        %633 = vadd.xlane.f32.xlu0 %v632
        %v634 = vpop.xlane.xlu0 %633
        %635 = vrot.lane.b32.xlu0 %v539, 64
        %v636 = vpop.permute.xlu0 %635
        %v639 = vsel %vm550, %v631, 0
        %641 = vmatprep.subr.mxu0 0.0
        %642 = vmatpush1.msra.mxu0 %v636
        %643 = vmatprep.subr.mxu0 0.0
        %644 = vmatpush1.msra.mxu0 0.0
        %645 = vmatprep.subr.mxu0 0.0
        %646 = vmatpush1.msra.mxu0 0.0
        %647 = vmatprep.subr.mxu0 0.0
        %648 = vmatpush1.msra.mxu0 0.0
        %649 = vmatprep.subr.mxu0 0.0
        %650 = vmatpush1.msra.mxu0 0.0
        %651 = vmatprep.subr.mxu0 0.0
        %652 = vmatpush1.msra.mxu0 0.0
        %653 = vmatprep.subr.mxu0 0.0
        %654 = vmatpush1.msra.mxu0 0.0
        %655 = vmatprep.subr.mxu0 0.0
        %656 = vmatpush1.msra.mxu0 0.0
        %657 = vmatprep.subr.mxu0 0.0
        %658 = vmatpush1.msra.mxu0 0.0
        %659 = vmatprep.subr.mxu0 0.0
        %660 = vmatpush1.msra.mxu0 0.0
        %661 = vmatprep.subr.mxu0 0.0
        %662 = vmatpush1.msra.mxu0 0.0
        %663 = vmatprep.subr.mxu0 0.0
        %664 = vmatpush1.msra.mxu0 0.0
        %665 = vmatprep.subr.mxu0 0.0
        %666 = vmatpush1.msra.mxu0 0.0
        %667 = vmatprep.subr.mxu0 0.0
        %668 = vmatpush1.msra.mxu0 0.0
        %669 = vmatprep.subr.mxu0 0.0
        %670 = vmatpush1.msra.mxu0 0.0
        %671 = vmatprep.subr.mxu0 0.0
        %672 = vmatpush1.msra.mxu0 0.0
        %673 = vmatprep.subr.mxu0 0.0
        %674 = vmatpush1.msra.mxu0 0.0
        %675 = vmatprep.subr.mxu0 0.0
        %676 = vmatpush1.msra.mxu0 0.0
        %677 = vmatprep.subr.mxu0 0.0
        %678 = vmatpush1.msra.mxu0 0.0
        %679 = vmatprep.subr.mxu0 0.0
        %680 = vmatpush1.msra.mxu0 0.0
        %681 = vmatprep.subr.mxu0 0.0
        %682 = vmatpush1.msra.mxu0 0.0
        %683 = vmatprep.subr.mxu0 0.0
        %684 = vmatpush1.msra.mxu0 0.0
        %685 = vmatprep.subr.mxu0 0.0
        %686 = vmatpush1.msra.mxu0 0.0
        %687 = vmatprep.subr.mxu0 0.0
        %688 = vmatpush1.msra.mxu0 0.0
        %689 = vmatprep.subr.mxu0 0.0
        %690 = vmatpush1.msra.mxu0 0.0
        %691 = vmatprep.subr.mxu0 0.0
        %692 = vmatpush1.msra.mxu0 0.0
        %693 = vmatprep.subr.mxu0 0.0
        %694 = vmatpush1.msra.mxu0 0.0
        %695 = vmatprep.subr.mxu0 0.0
        %696 = vmatpush1.msra.mxu0 0.0
        %697 = vmatprep.subr.mxu0 0.0
        %698 = vmatpush1.msra.mxu0 0.0
        %699 = vmatprep.subr.mxu0 0.0
        %700 = vmatpush1.msra.mxu0 0.0
        %701 = vmatprep.subr.mxu0 0.0
        %702 = vmatpush1.msra.mxu0 0.0
        %703 = vmatprep.subr.mxu0 0.0
        %704 = vmatpush1.msra.mxu0 0.0
        %705 = vmatprep.mubr.f32.mxu0 0.0
        %706 = vmatmul.mubr.f32.gmra.mrb[0].mxu0 %v639
        %v707 = vpop.f32.mrb[0].mxu0
        %v708 = vadd.f32 0.0, %v707
        %v709 = vpop.f32.mrb[0].mxu0
        %710 = vdwg.mxu0
        %v711 = vrcp.pop %v634
        %v712 = vmul.f32 %v708, %v711
        %713 = vrot.lane.b32.xlu0 %v542, 120
        %v714 = vpop.permute.xlu0 %713
        %715 = vrot.lane.b32.xlu0 %v539, 88
        %v716 = vpop.permute.xlu0 %715
        %v717 = vsel %vm550, %v714, 0
        %v719 = vsel %vm550, %v716, 0
        %721 = vmatprep.subr.mxu0 0.0
        %722 = vmatpush1.xpose.msra.mxu0 %v719
        %723 = vmatprep.subr.mxu0 0.0
        %724 = vmatpush1.xpose.msra.mxu0 0.0
        %725 = vmatprep.subr.mxu0 0.0
        %726 = vmatpush1.xpose.msra.mxu0 0.0
        %727 = vmatprep.subr.mxu0 0.0
        %728 = vmatpush1.xpose.msra.mxu0 0.0
        %729 = vmatprep.subr.mxu0 0.0
        %730 = vmatpush1.xpose.msra.mxu0 0.0
        %731 = vmatprep.subr.mxu0 0.0
        %732 = vmatpush1.xpose.msra.mxu0 0.0
        %733 = vmatprep.subr.mxu0 0.0
        %734 = vmatpush1.xpose.msra.mxu0 0.0
        %735 = vmatprep.subr.mxu0 0.0
        %736 = vmatpush1.xpose.msra.mxu0 0.0
        %737 = vmatprep.subr.mxu0 0.0
        %738 = vmatpush1.xpose.msra.mxu0 0.0
        %739 = vmatprep.subr.mxu0 0.0
        %740 = vmatpush1.xpose.msra.mxu0 0.0
        %741 = vmatprep.subr.mxu0 0.0
        %742 = vmatpush1.xpose.msra.mxu0 0.0
        %743 = vmatprep.subr.mxu0 0.0
        %744 = vmatpush1.xpose.msra.mxu0 0.0
        %745 = vmatprep.subr.mxu0 0.0
        %746 = vmatpush1.xpose.msra.mxu0 0.0
        %747 = vmatprep.subr.mxu0 0.0
        %748 = vmatpush1.xpose.msra.mxu0 0.0
        %749 = vmatprep.subr.mxu0 0.0
        %750 = vmatpush1.xpose.msra.mxu0 0.0
        %751 = vmatprep.subr.mxu0 0.0
        %752 = vmatpush1.xpose.msra.mxu0 0.0
        %753 = vmatprep.subr.mxu0 0.0
        %754 = vmatpush1.xpose.msra.mxu0 0.0
        %755 = vmatprep.subr.mxu0 0.0
        %756 = vmatpush1.xpose.msra.mxu0 0.0
        %757 = vmatprep.subr.mxu0 0.0
        %758 = vmatpush1.xpose.msra.mxu0 0.0
        %759 = vmatprep.subr.mxu0 0.0
        %760 = vmatpush1.xpose.msra.mxu0 0.0
        %761 = vmatprep.subr.mxu0 0.0
        %762 = vmatpush1.xpose.msra.mxu0 0.0
        %763 = vmatprep.subr.mxu0 0.0
        %764 = vmatpush1.xpose.msra.mxu0 0.0
        %765 = vmatprep.subr.mxu0 0.0
        %766 = vmatpush1.xpose.msra.mxu0 0.0
        %767 = vmatprep.subr.mxu0 0.0
        %768 = vmatpush1.xpose.msra.mxu0 0.0
        %769 = vmatprep.subr.mxu0 0.0
        %770 = vmatpush1.xpose.msra.mxu0 0.0
        %771 = vmatprep.subr.mxu0 0.0
        %772 = vmatpush1.xpose.msra.mxu0 0.0
        %773 = vmatprep.subr.mxu0 0.0
        %774 = vmatpush1.xpose.msra.mxu0 0.0
        %775 = vmatprep.subr.mxu0 0.0
        %776 = vmatpush1.xpose.msra.mxu0 0.0
        %777 = vmatprep.subr.mxu0 0.0
        %778 = vmatpush1.xpose.msra.mxu0 0.0
        %779 = vmatprep.subr.mxu0 0.0
        %780 = vmatpush1.xpose.msra.mxu0 0.0
        %781 = vmatprep.subr.mxu0 0.0
        %782 = vmatpush1.xpose.msra.mxu0 0.0
        %783 = vmatprep.subr.mxu0 0.0
        %784 = vmatpush1.xpose.msra.mxu0 0.0
        %785 = vmatprep.mubr.f32.mxu0 0.0
        %786 = vmatmul.mubr.f32.gmra.mrb[0].mxu0 %v717
        %v787 = vpop.f32.mrb[0].mxu0
        %v788 = vadd.f32 0.0, %v787
        %v789 = vpop.f32.mrb[0].mxu0
        %790 = vdwg.mxu0
        %v791 = vsel %vm550, %v788, -inf
        %792 = vmax.xlane.f32.xlu0 %v791
        %v793 = vpop.xlane.xlu0 %792
        %v794 = vsub.f32 %v788, %v793
        %v795 = vmul.f32 %v794, 1.442695
        %v796 = vpow.pop %v795
        %v797 = vsel %vm550, %v796, 0.0
        %798 = vadd.xlane.f32.xlu0 %v797
        %v799 = vpop.xlane.xlu0 %798
        %800 = vrot.lane.b32.xlu0 %v539, 56
        %v801 = vpop.permute.xlu0 %800
        %v804 = vsel %vm550, %v796, 0
        %806 = vmatprep.subr.mxu0 0.0
        %807 = vmatpush1.msra.mxu0 %v801
        %808 = vmatprep.subr.mxu0 0.0
        %809 = vmatpush1.msra.mxu0 0.0
        %810 = vmatprep.subr.mxu0 0.0
        %811 = vmatpush1.msra.mxu0 0.0
        %812 = vmatprep.subr.mxu0 0.0
        %813 = vmatpush1.msra.mxu0 0.0
        %814 = vmatprep.subr.mxu0 0.0
        %815 = vmatpush1.msra.mxu0 0.0
        %816 = vmatprep.subr.mxu0 0.0
        %817 = vmatpush1.msra.mxu0 0.0
        %818 = vmatprep.subr.mxu0 0.0
        %819 = vmatpush1.msra.mxu0 0.0
        %820 = vmatprep.subr.mxu0 0.0
        %821 = vmatpush1.msra.mxu0 0.0
        %822 = vmatprep.subr.mxu0 0.0
        %823 = vmatpush1.msra.mxu0 0.0
        %824 = vmatprep.subr.mxu0 0.0
        %825 = vmatpush1.msra.mxu0 0.0
        %826 = vmatprep.subr.mxu0 0.0
        %827 = vmatpush1.msra.mxu0 0.0
        %828 = vmatprep.subr.mxu0 0.0
        %829 = vmatpush1.msra.mxu0 0.0
        %830 = vmatprep.subr.mxu0 0.0
        %831 = vmatpush1.msra.mxu0 0.0
        %832 = vmatprep.subr.mxu0 0.0
        %833 = vmatpush1.msra.mxu0 0.0
        %834 = vmatprep.subr.mxu0 0.0
        %835 = vmatpush1.msra.mxu0 0.0
        %836 = vmatprep.subr.mxu0 0.0
        %837 = vmatpush1.msra.mxu0 0.0
        %838 = vmatprep.subr.mxu0 0.0
        %839 = vmatpush1.msra.mxu0 0.0
        %840 = vmatprep.subr.mxu0 0.0
        %841 = vmatpush1.msra.mxu0 0.0
        %842 = vmatprep.subr.mxu0 0.0
        %843 = vmatpush1.msra.mxu0 0.0
        %844 = vmatprep.subr.mxu0 0.0
        %845 = vmatpush1.msra.mxu0 0.0
        %846 = vmatprep.subr.mxu0 0.0
        %847 = vmatpush1.msra.mxu0 0.0
        %848 = vmatprep.subr.mxu0 0.0
        %849 = vmatpush1.msra.mxu0 0.0
        %850 = vmatprep.subr.mxu0 0.0
        %851 = vmatpush1.msra.mxu0 0.0
        %852 = vmatprep.subr.mxu0 0.0
        %853 = vmatpush1.msra.mxu0 0.0
        %854 = vmatprep.subr.mxu0 0.0
        %855 = vmatpush1.msra.mxu0 0.0
        %856 = vmatprep.subr.mxu0 0.0
        %857 = vmatpush1.msra.mxu0 0.0
        %858 = vmatprep.subr.mxu0 0.0
        %859 = vmatpush1.msra.mxu0 0.0
        %860 = vmatprep.subr.mxu0 0.0
        %861 = vmatpush1.msra.mxu0 0.0
        %862 = vmatprep.subr.mxu0 0.0
        %863 = vmatpush1.msra.mxu0 0.0
        %864 = vmatprep.subr.mxu0 0.0
        %865 = vmatpush1.msra.mxu0 0.0
        %866 = vmatprep.subr.mxu0 0.0
        %867 = vmatpush1.msra.mxu0 0.0
        %868 = vmatprep.subr.mxu0 0.0
        %869 = vmatpush1.msra.mxu0 0.0
        %870 = vmatprep.mubr.f32.mxu0 0.0
        %871 = vmatmul.mubr.f32.gmra.mrb[0].mxu0 %v804
        %v872 = vpop.f32.mrb[0].mxu0
        %v873 = vadd.f32 0.0, %v872
        %v874 = vpop.f32.mrb[0].mxu0
        %875 = vdwg.mxu0
        %v876 = vrcp.pop %v799
        %v877 = vmul.f32 %v873, %v876
        %v879 = vsel %vm550, %v877, 0
        %881 = vmatprep.subr.mxu0 0.0
        %882 = vmatpush1.msra.mxu0 %v544
        %883 = vmatprep.subr.mxu0 0.0
        %884 = vmatpush1.msra.mxu0 0.0
        %885 = vmatprep.subr.mxu0 0.0
        %886 = vmatpush1.msra.mxu0 0.0
        %887 = vmatprep.subr.mxu0 0.0
        %888 = vmatpush1.msra.mxu0 0.0
        %889 = vmatprep.subr.mxu0 0.0
        %890 = vmatpush1.msra.mxu0 0.0
        %891 = vmatprep.subr.mxu0 0.0
        %892 = vmatpush1.msra.mxu0 0.0
        %893 = vmatprep.subr.mxu0 0.0
        %894 = vmatpush1.msra.mxu0 0.0
        %895 = vmatprep.subr.mxu0 0.0
        %896 = vmatpush1.msra.mxu0 0.0
        %897 = vmatprep.subr.mxu0 0.0
        %898 = vmatpush1.msra.mxu0 0.0
        %899 = vmatprep.subr.mxu0 0.0
        %900 = vmatpush1.msra.mxu0 0.0
        %901 = vmatprep.subr.mxu0 0.0
        %902 = vmatpush1.msra.mxu0 0.0
        %903 = vmatprep.subr.mxu0 0.0
        %904 = vmatpush1.msra.mxu0 0.0
        %905 = vmatprep.subr.mxu0 0.0
        %906 = vmatpush1.msra.mxu0 0.0
        %907 = vmatprep.subr.mxu0 0.0
        %908 = vmatpush1.msra.mxu0 0.0
        %909 = vmatprep.subr.mxu0 0.0
        %910 = vmatpush1.msra.mxu0 0.0
        %911 = vmatprep.subr.mxu0 0.0
        %912 = vmatpush1.msra.mxu0 0.0
        %913 = vmatprep.subr.mxu0 0.0
        %914 = vmatpush1.msra.mxu0 0.0
        %915 = vmatprep.subr.mxu0 0.0
        %916 = vmatpush1.msra.mxu0 0.0
        %917 = vmatprep.subr.mxu0 0.0
        %918 = vmatpush1.msra.mxu0 0.0
        %919 = vmatprep.subr.mxu0 0.0
        %920 = vmatpush1.msra.mxu0 0.0
        %921 = vmatprep.subr.mxu0 0.0
        %922 = vmatpush1.msra.mxu0 0.0
        %923 = vmatprep.subr.mxu0 0.0
        %924 = vmatpush1.msra.mxu0 0.0
        %925 = vmatprep.subr.mxu0 0.0
        %926 = vmatpush1.msra.mxu0 0.0
        %927 = vmatprep.subr.mxu0 0.0
        %928 = vmatpush1.msra.mxu0 0.0
        %929 = vmatprep.subr.mxu0 0.0
        %930 = vmatpush1.msra.mxu0 0.0
        %931 = vmatprep.subr.mxu0 0.0
        %932 = vmatpush1.msra.mxu0 0.0
        %933 = vmatprep.subr.mxu0 0.0
        %934 = vmatpush1.msra.mxu0 0.0
        %935 = vmatprep.subr.mxu0 0.0
        %936 = vmatpush1.msra.mxu0 0.0
        %937 = vmatprep.subr.mxu0 0.0
        %938 = vmatpush1.msra.mxu0 0.0
        %939 = vmatprep.subr.mxu0 0.0
        %940 = vmatpush1.msra.mxu0 0.0
        %941 = vmatprep.subr.mxu0 0.0
        %942 = vmatpush1.msra.mxu0 0.0
        %943 = vmatprep.subr.mxu0 0.0
        %944 = vmatpush1.msra.mxu0 0.0
        %945 = vmatprep.mubr.f32.mxu0 0.0
        %946 = vmatmul.mubr.f32.gmra.mrb[0].mxu0 %v879
        %v947 = vpop.f32.mrb[0].mxu0
        %v948 = vadd.f32 0.0, %v947
        %v949 = vpop.f32.mrb[0].mxu0
        %950 = vdwg.mxu0
        %v952 = vsel %vm550, %v712, 0
        %954 = vmatprep.subr.mxu0 0.0
        %955 = vmatpush1.msra.mxu0 %v543
        %956 = vmatprep.subr.mxu0 0.0
        %957 = vmatpush1.msra.mxu0 0.0
        %958 = vmatprep.subr.mxu0 0.0
        %959 = vmatpush1.msra.mxu0 0.0
        %960 = vmatprep.subr.mxu0 0.0
        %961 = vmatpush1.msra.mxu0 0.0
        %962 = vmatprep.subr.mxu0 0.0
        %963 = vmatpush1.msra.mxu0 0.0
        %964 = vmatprep.subr.mxu0 0.0
        %965 = vmatpush1.msra.mxu0 0.0
        %966 = vmatprep.subr.mxu0 0.0
        %967 = vmatpush1.msra.mxu0 0.0
        %968 = vmatprep.subr.mxu0 0.0
        %969 = vmatpush1.msra.mxu0 0.0
        %970 = vmatprep.subr.mxu0 0.0
        %971 = vmatpush1.msra.mxu0 0.0
        %972 = vmatprep.subr.mxu0 0.0
        %973 = vmatpush1.msra.mxu0 0.0
        %974 = vmatprep.subr.mxu0 0.0
        %975 = vmatpush1.msra.mxu0 0.0
        %976 = vmatprep.subr.mxu0 0.0
        %977 = vmatpush1.msra.mxu0 0.0
        %978 = vmatprep.subr.mxu0 0.0
        %979 = vmatpush1.msra.mxu0 0.0
        %980 = vmatprep.subr.mxu0 0.0
        %981 = vmatpush1.msra.mxu0 0.0
        %982 = vmatprep.subr.mxu0 0.0
        %983 = vmatpush1.msra.mxu0 0.0
        %984 = vmatprep.subr.mxu0 0.0
        %985 = vmatpush1.msra.mxu0 0.0
        %986 = vmatprep.subr.mxu0 0.0
        %987 = vmatpush1.msra.mxu0 0.0
        %988 = vmatprep.subr.mxu0 0.0
        %989 = vmatpush1.msra.mxu0 0.0
        %990 = vmatprep.subr.mxu0 0.0
        %991 = vmatpush1.msra.mxu0 0.0
        %992 = vmatprep.subr.mxu0 0.0
        %993 = vmatpush1.msra.mxu0 0.0
        %994 = vmatprep.subr.mxu0 0.0
        %995 = vmatpush1.msra.mxu0 0.0
        %996 = vmatprep.subr.mxu0 0.0
        %997 = vmatpush1.msra.mxu0 0.0
        %998 = vmatprep.subr.mxu0 0.0
        %999 = vmatpush1.msra.mxu0 0.0
        %1000 = vmatprep.subr.mxu0 0.0
        %1001 = vmatpush1.msra.mxu0 0.0
        %1002 = vmatprep.subr.mxu0 0.0
        %1003 = vmatpush1.msra.mxu0 0.0
        %1004 = vmatprep.subr.mxu0 0.0
        %1005 = vmatpush1.msra.mxu0 0.0
        %1006 = vmatprep.subr.mxu0 0.0
        %1007 = vmatpush1.msra.mxu0 0.0
        %1008 = vmatprep.subr.mxu0 0.0
        %1009 = vmatpush1.msra.mxu0 0.0
        %1010 = vmatprep.subr.mxu0 0.0
        %1011 = vmatpush1.msra.mxu0 0.0
        %1012 = vmatprep.subr.mxu0 0.0
        %1013 = vmatpush1.msra.mxu0 0.0
        %1014 = vmatprep.subr.mxu0 0.0
        %1015 = vmatpush1.msra.mxu0 0.0
        %1016 = vmatprep.subr.mxu0 0.0
        %1017 = vmatpush1.msra.mxu0 0.0
        %1018 = vmatprep.mubr.f32.mxu0 0.0
        %1019 = vmatmul.mubr.f32.gmra.mrb[0].mxu0 %v952
        %v1020 = vpop.f32.mrb[0].mxu0
        %v1021 = vadd.f32 %v948, %v1020
        %v1022 = vpop.f32.mrb[0].mxu0
        %1023 = vdwg.mxu0
        %1024 = vrot.lane.b32.xlu0 %v542, 112
        %v1025 = vpop.permute.xlu0 %1024
        %1026 = vrot.lane.b32.xlu0 %v539, 80
        %v1027 = vpop.permute.xlu0 %1026
        %v1028 = vsel %vm550, %v1025, 0
        %v1030 = vsel %vm550, %v1027, 0
        %1032 = vmatprep.subr.mxu0 0.0
        %1033 = vmatpush1.xpose.msra.mxu0 %v1030
        %1034 = vmatprep.subr.mxu0 0.0
        %1035 = vmatpush1.xpose.msra.mxu0 0.0
        %1036 = vmatprep.subr.mxu0 0.0
        %1037 = vmatpush1.xpose.msra.mxu0 0.0
        %1038 = vmatprep.subr.mxu0 0.0
        %1039 = vmatpush1.xpose.msra.mxu0 0.0
        %1040 = vmatprep.subr.mxu0 0.0
        %1041 = vmatpush1.xpose.msra.mxu0 0.0
        %1042 = vmatprep.subr.mxu0 0.0
        %1043 = vmatpush1.xpose.msra.mxu0 0.0
        %1044 = vmatprep.subr.mxu0 0.0
        %1045 = vmatpush1.xpose.msra.mxu0 0.0
        %1046 = vmatprep.subr.mxu0 0.0
        %1047 = vmatpush1.xpose.msra.mxu0 0.0
        %1048 = vmatprep.subr.mxu0 0.0
        %1049 = vmatpush1.xpose.msra.mxu0 0.0
        %1050 = vmatprep.subr.mxu0 0.0
        %1051 = vmatpush1.xpose.msra.mxu0 0.0
        %1052 = vmatprep.subr.mxu0 0.0
        %1053 = vmatpush1.xpose.msra.mxu0 0.0
        %1054 = vmatprep.subr.mxu0 0.0
        %1055 = vmatpush1.xpose.msra.mxu0 0.0
        %1056 = vmatprep.subr.mxu0 0.0
        %1057 = vmatpush1.xpose.msra.mxu0 0.0
        %1058 = vmatprep.subr.mxu0 0.0
        %1059 = vmatpush1.xpose.msra.mxu0 0.0
        %1060 = vmatprep.subr.mxu0 0.0
        %1061 = vmatpush1.xpose.msra.mxu0 0.0
        %1062 = vmatprep.subr.mxu0 0.0
        %1063 = vmatpush1.xpose.msra.mxu0 0.0
        %1064 = vmatprep.subr.mxu0 0.0
        %1065 = vmatpush1.xpose.msra.mxu0 0.0
        %1066 = vmatprep.subr.mxu0 0.0
        %1067 = vmatpush1.xpose.msra.mxu0 0.0
        %1068 = vmatprep.subr.mxu0 0.0
        %1069 = vmatpush1.xpose.msra.mxu0 0.0
        %1070 = vmatprep.subr.mxu0 0.0
        %1071 = vmatpush1.xpose.msra.mxu0 0.0
        %1072 = vmatprep.subr.mxu0 0.0
        %1073 = vmatpush1.xpose.msra.mxu0 0.0
        %1074 = vmatprep.subr.mxu0 0.0
        %1075 = vmatpush1.xpose.msra.mxu0 0.0
        %1076 = vmatprep.subr.mxu0 0.0
        %1077 = vmatpush1.xpose.msra.mxu0 0.0
        %1078 = vmatprep.subr.mxu0 0.0
        %1079 = vmatpush1.xpose.msra.mxu0 0.0
        %1080 = vmatprep.subr.mxu0 0.0
        %1081 = vmatpush1.xpose.msra.mxu0 0.0
        %1082 = vmatprep.subr.mxu0 0.0
        %1083 = vmatpush1.xpose.msra.mxu0 0.0
        %1084 = vmatprep.subr.mxu0 0.0
        %1085 = vmatpush1.xpose.msra.mxu0 0.0
        %1086 = vmatprep.subr.mxu0 0.0
        %1087 = vmatpush1.xpose.msra.mxu0 0.0
        %1088 = vmatprep.subr.mxu0 0.0
        %1089 = vmatpush1.xpose.msra.mxu0 0.0
        %1090 = vmatprep.subr.mxu0 0.0
        %1091 = vmatpush1.xpose.msra.mxu0 0.0
        %1092 = vmatprep.subr.mxu0 0.0
        %1093 = vmatpush1.xpose.msra.mxu0 0.0
        %1094 = vmatprep.subr.mxu0 0.0
        %1095 = vmatpush1.xpose.msra.mxu0 0.0
        %1096 = vmatprep.mubr.f32.mxu0 0.0
        %1097 = vmatmul.mubr.f32.gmra.mrb[0].mxu0 %v1028
        %v1098 = vpop.f32.mrb[0].mxu0
        %v1099 = vadd.f32 0.0, %v1098
        %v1100 = vpop.f32.mrb[0].mxu0
        %1101 = vdwg.mxu0
        %v1102 = vsel %vm550, %v1099, -inf
        %1103 = vmax.xlane.f32.xlu0 %v1102
        %v1104 = vpop.xlane.xlu0 %1103
        %v1105 = vsub.f32 %v1099, %v1104
        %v1106 = vmul.f32 %v1105, 1.442695
        %v1107 = vpow.pop %v1106
        %v1108 = vsel %vm550, %v1107, 0.0
        %1109 = vadd.xlane.f32.xlu0 %v1108
        %v1110 = vpop.xlane.xlu0 %1109
        %1111 = vrot.lane.b32.xlu0 %v539, 48
        %v1112 = vpop.permute.xlu0 %1111
        %v1115 = vsel %vm550, %v1107, 0
        %1117 = vmatprep.subr.mxu0 0.0
        %1118 = vmatpush1.msra.mxu0 %v1112
        %1119 = vmatprep.subr.mxu0 0.0
        %1120 = vmatpush1.msra.mxu0 0.0
        %1121 = vmatprep.subr.mxu0 0.0
        %1122 = vmatpush1.msra.mxu0 0.0
        %1123 = vmatprep.subr.mxu0 0.0
        %1124 = vmatpush1.msra.mxu0 0.0
        %1125 = vmatprep.subr.mxu0 0.0
        %1126 = vmatpush1.msra.mxu0 0.0
        %1127 = vmatprep.subr.mxu0 0.0
        %1128 = vmatpush1.msra.mxu0 0.0
        %1129 = vmatprep.subr.mxu0 0.0
        %1130 = vmatpush1.msra.mxu0 0.0
        %1131 = vmatprep.subr.mxu0 0.0
        %1132 = vmatpush1.msra.mxu0 0.0
        %1133 = vmatprep.subr.mxu0 0.0
        %1134 = vmatpush1.msra.mxu0 0.0
        %1135 = vmatprep.subr.mxu0 0.0
        %1136 = vmatpush1.msra.mxu0 0.0
        %1137 = vmatprep.subr.mxu0 0.0
        %1138 = vmatpush1.msra.mxu0 0.0
        %1139 = vmatprep.subr.mxu0 0.0
        %1140 = vmatpush1.msra.mxu0 0.0
        %1141 = vmatprep.subr.mxu0 0.0
        %1142 = vmatpush1.msra.mxu0 0.0
        %1143 = vmatprep.subr.mxu0 0.0
        %1144 = vmatpush1.msra.mxu0 0.0
        %1145 = vmatprep.subr.mxu0 0.0
        %1146 = vmatpush1.msra.mxu0 0.0
        %1147 = vmatprep.subr.mxu0 0.0
        %1148 = vmatpush1.msra.mxu0 0.0
        %1149 = vmatprep.subr.mxu0 0.0
        %1150 = vmatpush1.msra.mxu0 0.0
        %1151 = vmatprep.subr.mxu0 0.0
        %1152 = vmatpush1.msra.mxu0 0.0
        %1153 = vmatprep.subr.mxu0 0.0
        %1154 = vmatpush1.msra.mxu0 0.0
        %1155 = vmatprep.subr.mxu0 0.0
        %1156 = vmatpush1.msra.mxu0 0.0
        %1157 = vmatprep.subr.mxu0 0.0
        %1158 = vmatpush1.msra.mxu0 0.0
        %1159 = vmatprep.subr.mxu0 0.0
        %1160 = vmatpush1.msra.mxu0 0.0
        %1161 = vmatprep.subr.mxu0 0.0
        %1162 = vmatpush1.msra.mxu0 0.0
        %1163 = vmatprep.subr.mxu0 0.0
        %1164 = vmatpush1.msra.mxu0 0.0
        %1165 = vmatprep.subr.mxu0 0.0
        %1166 = vmatpush1.msra.mxu0 0.0
        %1167 = vmatprep.subr.mxu0 0.0
        %1168 = vmatpush1.msra.mxu0 0.0
        %1169 = vmatprep.subr.mxu0 0.0
        %1170 = vmatpush1.msra.mxu0 0.0
        %1171 = vmatprep.subr.mxu0 0.0
        %1172 = vmatpush1.msra.mxu0 0.0
        %1173 = vmatprep.subr.mxu0 0.0
        %1174 = vmatpush1.msra.mxu0 0.0
        %1175 = vmatprep.subr.mxu0 0.0
        %1176 = vmatpush1.msra.mxu0 0.0
        %1177 = vmatprep.subr.mxu0 0.0
        %1178 = vmatpush1.msra.mxu0 0.0
        %1179 = vmatprep.subr.mxu0 0.0
        %1180 = vmatpush1.msra.mxu0 0.0
        %1181 = vmatprep.mubr.f32.mxu0 0.0
        %1182 = vmatmul.mubr.f32.gmra.mrb[0].mxu0 %v1115
        %v1183 = vpop.f32.mrb[0].mxu0
        %v1184 = vadd.f32 0.0, %v1183
        %v1185 = vpop.f32.mrb[0].mxu0
        %1186 = vdwg.mxu0
        %v1187 = vrcp.pop %v1110
        %v1188 = vmul.f32 %v1184, %v1187
        %v1190 = vsel %vm550, %v1188, 0
        %1192 = vmatprep.subr.mxu0 0.0
        %1193 = vmatpush1.msra.mxu0 %v545
        %1194 = vmatprep.subr.mxu0 0.0
        %1195 = vmatpush1.msra.mxu0 0.0
        %1196 = vmatprep.subr.mxu0 0.0
        %1197 = vmatpush1.msra.mxu0 0.0
        %1198 = vmatprep.subr.mxu0 0.0
        %1199 = vmatpush1.msra.mxu0 0.0
        %1200 = vmatprep.subr.mxu0 0.0
        %1201 = vmatpush1.msra.mxu0 0.0
        %1202 = vmatprep.subr.mxu0 0.0
        %1203 = vmatpush1.msra.mxu0 0.0
        %1204 = vmatprep.subr.mxu0 0.0
        %1205 = vmatpush1.msra.mxu0 0.0
        %1206 = vmatprep.subr.mxu0 0.0
        %1207 = vmatpush1.msra.mxu0 0.0
        %1208 = vmatprep.subr.mxu0 0.0
        %1209 = vmatpush1.msra.mxu0 0.0
        %1210 = vmatprep.subr.mxu0 0.0
        %1211 = vmatpush1.msra.mxu0 0.0
        %1212 = vmatprep.subr.mxu0 0.0
        %1213 = vmatpush1.msra.mxu0 0.0
        %1214 = vmatprep.subr.mxu0 0.0
        %1215 = vmatpush1.msra.mxu0 0.0
        %1216 = vmatprep.subr.mxu0 0.0
        %1217 = vmatpush1.msra.mxu0 0.0
        %1218 = vmatprep.subr.mxu0 0.0
        %1219 = vmatpush1.msra.mxu0 0.0
        %1220 = vmatprep.subr.mxu0 0.0
        %1221 = vmatpush1.msra.mxu0 0.0
        %1222 = vmatprep.subr.mxu0 0.0
        %1223 = vmatpush1.msra.mxu0 0.0
        %1224 = vmatprep.subr.mxu0 0.0
        %1225 = vmatpush1.msra.mxu0 0.0
        %1226 = vmatprep.subr.mxu0 0.0
        %1227 = vmatpush1.msra.mxu0 0.0
        %1228 = vmatprep.subr.mxu0 0.0
        %1229 = vmatpush1.msra.mxu0 0.0
        %1230 = vmatprep.subr.mxu0 0.0
        %1231 = vmatpush1.msra.mxu0 0.0
        %1232 = vmatprep.subr.mxu0 0.0
        %1233 = vmatpush1.msra.mxu0 0.0
        %1234 = vmatprep.subr.mxu0 0.0
        %1235 = vmatpush1.msra.mxu0 0.0
        %1236 = vmatprep.subr.mxu0 0.0
        %1237 = vmatpush1.msra.mxu0 0.0
        %1238 = vmatprep.subr.mxu0 0.0
        %1239 = vmatpush1.msra.mxu0 0.0
        %1240 = vmatprep.subr.mxu0 0.0
        %1241 = vmatpush1.msra.mxu0 0.0
        %1242 = vmatprep.subr.mxu0 0.0
        %1243 = vmatpush1.msra.mxu0 0.0
        %1244 = vmatprep.subr.mxu0 0.0
        %1245 = vmatpush1.msra.mxu0 0.0
        %1246 = vmatprep.subr.mxu0 0.0
        %1247 = vmatpush1.msra.mxu0 0.0
        %1248 = vmatprep.subr.mxu0 0.0
        %1249 = vmatpush1.msra.mxu0 0.0
        %1250 = vmatprep.subr.mxu0 0.0
        %1251 = vmatpush1.msra.mxu0 0.0
        %1252 = vmatprep.subr.mxu0 0.0
        %1253 = vmatpush1.msra.mxu0 0.0
        %1254 = vmatprep.subr.mxu0 0.0
        %1255 = vmatpush1.msra.mxu0 0.0
        %1256 = vmatprep.mubr.f32.mxu0 0.0
        %1257 = vmatmul.mubr.f32.gmra.mrb[0].mxu0 %v1190
        %v1258 = vpop.f32.mrb[0].mxu0
        %v1259 = vadd.f32 0.0, %v1258
        %v1260 = vpop.f32.mrb[0].mxu0
        %1261 = vdwg.mxu0
        %v1262 = vadd.f32 %v1021, %v1259
        %1263 = vrot.lane.b32.xlu0 %v542, 104
        %v1264 = vpop.permute.xlu0 %1263
        %1265 = vrot.lane.b32.xlu0 %v539, 72
        %v1266 = vpop.permute.xlu0 %1265
        %v1267 = vsel %vm550, %v1264, 0
        %v1269 = vsel %vm550, %v1266, 0
        %1271 = vmatprep.subr.mxu0 0.0
        %1272 = vmatpush1.xpose.msra.mxu0 %v1269
        %1273 = vmatprep.subr.mxu0 0.0
        %1274 = vmatpush1.xpose.msra.mxu0 0.0
        %1275 = vmatprep.subr.mxu0 0.0
        %1276 = vmatpush1.xpose.msra.mxu0 0.0
        %1277 = vmatprep.subr.mxu0 0.0
        %1278 = vmatpush1.xpose.msra.mxu0 0.0
        %1279 = vmatprep.subr.mxu0 0.0
        %1280 = vmatpush1.xpose.msra.mxu0 0.0
        %1281 = vmatprep.subr.mxu0 0.0
        %1282 = vmatpush1.xpose.msra.mxu0 0.0
        %1283 = vmatprep.subr.mxu0 0.0
        %1284 = vmatpush1.xpose.msra.mxu0 0.0
        %1285 = vmatprep.subr.mxu0 0.0
        %1286 = vmatpush1.xpose.msra.mxu0 0.0
        %1287 = vmatprep.subr.mxu0 0.0
        %1288 = vmatpush1.xpose.msra.mxu0 0.0
        %1289 = vmatprep.subr.mxu0 0.0
        %1290 = vmatpush1.xpose.msra.mxu0 0.0
        %1291 = vmatprep.subr.mxu0 0.0
        %1292 = vmatpush1.xpose.msra.mxu0 0.0
        %1293 = vmatprep.subr.mxu0 0.0
        %1294 = vmatpush1.xpose.msra.mxu0 0.0
        %1295 = vmatprep.subr.mxu0 0.0
        %1296 = vmatpush1.xpose.msra.mxu0 0.0
        %1297 = vmatprep.subr.mxu0 0.0
        %1298 = vmatpush1.xpose.msra.mxu0 0.0
        %1299 = vmatprep.subr.mxu0 0.0
        %1300 = vmatpush1.xpose.msra.mxu0 0.0
        %1301 = vmatprep.subr.mxu0 0.0
        %1302 = vmatpush1.xpose.msra.mxu0 0.0
        %1303 = vmatprep.subr.mxu0 0.0
        %1304 = vmatpush1.xpose.msra.mxu0 0.0
        %1305 = vmatprep.subr.mxu0 0.0
        %1306 = vmatpush1.xpose.msra.mxu0 0.0
        %1307 = vmatprep.subr.mxu0 0.0
        %1308 = vmatpush1.xpose.msra.mxu0 0.0
        %1309 = vmatprep.subr.mxu0 0.0
        %1310 = vmatpush1.xpose.msra.mxu0 0.0
        %1311 = vmatprep.subr.mxu0 0.0
        %1312 = vmatpush1.xpose.msra.mxu0 0.0
        %1313 = vmatprep.subr.mxu0 0.0
        %1314 = vmatpush1.xpose.msra.mxu0 0.0
        %1315 = vmatprep.subr.mxu0 0.0
        %1316 = vmatpush1.xpose.msra.mxu0 0.0
        %1317 = vmatprep.subr.mxu0 0.0
        %1318 = vmatpush1.xpose.msra.mxu0 0.0
        %1319 = vmatprep.subr.mxu0 0.0
        %1320 = vmatpush1.xpose.msra.mxu0 0.0
        %1321 = vmatprep.subr.mxu0 0.0
        %1322 = vmatpush1.xpose.msra.mxu0 0.0
        %1323 = vmatprep.subr.mxu0 0.0
        %1324 = vmatpush1.xpose.msra.mxu0 0.0
        %1325 = vmatprep.subr.mxu0 0.0
        %1326 = vmatpush1.xpose.msra.mxu0 0.0
        %1327 = vmatprep.subr.mxu0 0.0
        %1328 = vmatpush1.xpose.msra.mxu0 0.0
        %1329 = vmatprep.subr.mxu0 0.0
        %1330 = vmatpush1.xpose.msra.mxu0 0.0
        %1331 = vmatprep.subr.mxu0 0.0
        %1332 = vmatpush1.xpose.msra.mxu0 0.0
        %1333 = vmatprep.subr.mxu0 0.0
        %1334 = vmatpush1.xpose.msra.mxu0 0.0
        %1335 = vmatprep.mubr.f32.mxu0 0.0
        %1336 = vmatmul.mubr.f32.gmra.mrb[0].mxu0 %v1267
        %v1337 = vpop.f32.mrb[0].mxu0
        %v1338 = vadd.f32 0.0, %v1337
        %v1339 = vpop.f32.mrb[0].mxu0
        %1340 = vdwg.mxu0
        %v1341 = vsel %vm550, %v1338, -inf
        %1342 = vmax.xlane.f32.xlu0 %v1341
        %v1343 = vpop.xlane.xlu0 %1342
        %v1344 = vsub.f32 %v1338, %v1343
        %v1345 = vmul.f32 %v1344, 1.442695
        %v1346 = vpow.pop %v1345
        %v1347 = vsel %vm550, %v1346, 0.0
        %1348 = vadd.xlane.f32.xlu0 %v1347
        %v1349 = vpop.xlane.xlu0 %1348
        %1350 = vrot.lane.b32.xlu0 %v539, 40
        %v1351 = vpop.permute.xlu0 %1350
        %v1354 = vsel %vm550, %v1346, 0
        %1356 = vmatprep.subr.mxu0 0.0
        %1357 = vmatpush1.msra.mxu0 %v1351
        %1358 = vmatprep.subr.mxu0 0.0
        %1359 = vmatpush1.msra.mxu0 0.0
        %1360 = vmatprep.subr.mxu0 0.0
        %1361 = vmatpush1.msra.mxu0 0.0
        %1362 = vmatprep.subr.mxu0 0.0
        %1363 = vmatpush1.msra.mxu0 0.0
        %1364 = vmatprep.subr.mxu0 0.0
        %1365 = vmatpush1.msra.mxu0 0.0
        %1366 = vmatprep.subr.mxu0 0.0
        %1367 = vmatpush1.msra.mxu0 0.0
        %1368 = vmatprep.subr.mxu0 0.0
        %1369 = vmatpush1.msra.mxu0 0.0
        %1370 = vmatprep.subr.mxu0 0.0
        %1371 = vmatpush1.msra.mxu0 0.0
        %1372 = vmatprep.subr.mxu0 0.0
        %1373 = vmatpush1.msra.mxu0 0.0
        %1374 = vmatprep.subr.mxu0 0.0
        %1375 = vmatpush1.msra.mxu0 0.0
        %1376 = vmatprep.subr.mxu0 0.0
        %1377 = vmatpush1.msra.mxu0 0.0
        %1378 = vmatprep.subr.mxu0 0.0
        %1379 = vmatpush1.msra.mxu0 0.0
        %1380 = vmatprep.subr.mxu0 0.0
        %1381 = vmatpush1.msra.mxu0 0.0
        %1382 = vmatprep.subr.mxu0 0.0
        %1383 = vmatpush1.msra.mxu0 0.0
        %1384 = vmatprep.subr.mxu0 0.0
        %1385 = vmatpush1.msra.mxu0 0.0
        %1386 = vmatprep.subr.mxu0 0.0
        %1387 = vmatpush1.msra.mxu0 0.0
        %1388 = vmatprep.subr.mxu0 0.0
        %1389 = vmatpush1.msra.mxu0 0.0
        %1390 = vmatprep.subr.mxu0 0.0
        %1391 = vmatpush1.msra.mxu0 0.0
        %1392 = vmatprep.subr.mxu0 0.0
        %1393 = vmatpush1.msra.mxu0 0.0
        %1394 = vmatprep.subr.mxu0 0.0
        %1395 = vmatpush1.msra.mxu0 0.0
        %1396 = vmatprep.subr.mxu0 0.0
        %1397 = vmatpush1.msra.mxu0 0.0
        %1398 = vmatprep.subr.mxu0 0.0
        %1399 = vmatpush1.msra.mxu0 0.0
        %1400 = vmatprep.subr.mxu0 0.0
        %1401 = vmatpush1.msra.mxu0 0.0
        %1402 = vmatprep.subr.mxu0 0.0
        %1403 = vmatpush1.msra.mxu0 0.0
        %1404 = vmatprep.subr.mxu0 0.0
        %1405 = vmatpush1.msra.mxu0 0.0
        %1406 = vmatprep.subr.mxu0 0.0
        %1407 = vmatpush1.msra.mxu0 0.0
        %1408 = vmatprep.subr.mxu0 0.0
        %1409 = vmatpush1.msra.mxu0 0.0
        %1410 = vmatprep.subr.mxu0 0.0
        %1411 = vmatpush1.msra.mxu0 0.0
        %1412 = vmatprep.subr.mxu0 0.0
        %1413 = vmatpush1.msra.mxu0 0.0
        %1414 = vmatprep.subr.mxu0 0.0
        %1415 = vmatpush1.msra.mxu0 0.0
        %1416 = vmatprep.subr.mxu0 0.0
        %1417 = vmatpush1.msra.mxu0 0.0
        %1418 = vmatprep.subr.mxu0 0.0
        %1419 = vmatpush1.msra.mxu0 0.0
        %1420 = vmatprep.mubr.f32.mxu0 0.0
        %1421 = vmatmul.mubr.f32.gmra.mrb[0].mxu0 %v1354
        %v1422 = vpop.f32.mrb[0].mxu0
        %v1423 = vadd.f32 0.0, %v1422
        %v1424 = vpop.f32.mrb[0].mxu0
        %1425 = vdwg.mxu0
        %v1426 = vrcp.pop %v1349
        %v1427 = vmul.f32 %v1423, %v1426
        %v1429 = vsel %vm550, %v1427, 0
        %1431 = vmatprep.subr.mxu0 0.0
        %1432 = vmatpush1.msra.mxu0 %v546
        %1433 = vmatprep.subr.mxu0 0.0
        %1434 = vmatpush1.msra.mxu0 0.0
        %1435 = vmatprep.subr.mxu0 0.0
        %1436 = vmatpush1.msra.mxu0 0.0
        %1437 = vmatprep.subr.mxu0 0.0
        %1438 = vmatpush1.msra.mxu0 0.0
        %1439 = vmatprep.subr.mxu0 0.0
        %1440 = vmatpush1.msra.mxu0 0.0
        %1441 = vmatprep.subr.mxu0 0.0
        %1442 = vmatpush1.msra.mxu0 0.0
        %1443 = vmatprep.subr.mxu0 0.0
        %1444 = vmatpush1.msra.mxu0 0.0
        %1445 = vmatprep.subr.mxu0 0.0
        %1446 = vmatpush1.msra.mxu0 0.0
        %1447 = vmatprep.subr.mxu0 0.0
        %1448 = vmatpush1.msra.mxu0 0.0
        %1449 = vmatprep.subr.mxu0 0.0
        %1450 = vmatpush1.msra.mxu0 0.0
        %1451 = vmatprep.subr.mxu0 0.0
        %1452 = vmatpush1.msra.mxu0 0.0
        %1453 = vmatprep.subr.mxu0 0.0
        %1454 = vmatpush1.msra.mxu0 0.0
        %1455 = vmatprep.subr.mxu0 0.0
        %1456 = vmatpush1.msra.mxu0 0.0
        %1457 = vmatprep.subr.mxu0 0.0
        %1458 = vmatpush1.msra.mxu0 0.0
        %1459 = vmatprep.subr.mxu0 0.0
        %1460 = vmatpush1.msra.mxu0 0.0
        %1461 = vmatprep.subr.mxu0 0.0
        %1462 = vmatpush1.msra.mxu0 0.0
        %1463 = vmatprep.subr.mxu0 0.0
        %1464 = vmatpush1.msra.mxu0 0.0
        %1465 = vmatprep.subr.mxu0 0.0
        %1466 = vmatpush1.msra.mxu0 0.0
        %1467 = vmatprep.subr.mxu0 0.0
        %1468 = vmatpush1.msra.mxu0 0.0
        %1469 = vmatprep.subr.mxu0 0.0
        %1470 = vmatpush1.msra.mxu0 0.0
        %1471 = vmatprep.subr.mxu0 0.0
        %1472 = vmatpush1.msra.mxu0 0.0
        %1473 = vmatprep.subr.mxu0 0.0
        %1474 = vmatpush1.msra.mxu0 0.0
        %1475 = vmatprep.subr.mxu0 0.0
        %1476 = vmatpush1.msra.mxu0 0.0
        %1477 = vmatprep.subr.mxu0 0.0
        %1478 = vmatpush1.msra.mxu0 0.0
        %1479 = vmatprep.subr.mxu0 0.0
        %1480 = vmatpush1.msra.mxu0 0.0
        %1481 = vmatprep.subr.mxu0 0.0
        %1482 = vmatpush1.msra.mxu0 0.0
        %1483 = vmatprep.subr.mxu0 0.0
        %1484 = vmatpush1.msra.mxu0 0.0
        %1485 = vmatprep.subr.mxu0 0.0
        %1486 = vmatpush1.msra.mxu0 0.0
        %1487 = vmatprep.subr.mxu0 0.0
        %1488 = vmatpush1.msra.mxu0 0.0
        %1489 = vmatprep.subr.mxu0 0.0
        %1490 = vmatpush1.msra.mxu0 0.0
        %1491 = vmatprep.subr.mxu0 0.0
        %1492 = vmatpush1.msra.mxu0 0.0
        %1493 = vmatprep.subr.mxu0 0.0
        %1494 = vmatpush1.msra.mxu0 0.0
        %1495 = vmatprep.mubr.f32.mxu0 0.0
        %1496 = vmatmul.mubr.f32.gmra.mrb[0].mxu0 %v1429
        %v1497 = vpop.f32.mrb[0].mxu0
        %v1498 = vadd.f32 0.0, %v1497
        %v1499 = vpop.f32.mrb[0].mxu0
        %1500 = vdwg.mxu0
        %v1501 = vadd.f32 %v1262, %v1498
        %v1502 = vld [vmem:[%s4] sm:$0x1]
        %v1504 = vlaneseq
        %v1505 = vshrl.u32 %v1504, 7
        %v1506 = vsub.s32 0, %v1505
        %v1507 = vrot.slane %v1502, %v1506
        %v1509 = vadd.f32 %v1501, %v1507
        %v1510 = vadd.f32 %v456, %v1509
        %v1511 = vsel %vm468, %v1510, 0.0
        %1512 = vadd.xlane.f32.xlu0 %v1511
        %v1513 = vpop.xlane.xlu0 %1512
        %v1514 = vrcp.pop 32.0
        %v1515 = vmul.f32 %v1513, %v1514
        %v1516 = vsub.f32 %v1510, %v1515
        %v1517 = vmul.f32 %v1516, %v1516
        %v1518 = vsel %vm468, %v1517, 0.0
        %1519 = vadd.xlane.f32.xlu0 %v1518
        %v1520 = vpop.xlane.xlu0 %1519
        %v1521 = vmul.f32 %v1520, %v1514
        %v1522 = vadd.f32 %v1521, 1e-05
        %v1523 = vrsqrt.pop %v1522
        %v1524 = vmul.f32 %v1516, %v1523
        %v1525 = vld [vmem:[%s9] sm:$0x1]
        %v1527 = vlaneseq
        %v1528 = vshrl.u32 %v1527, 7
        %v1529 = vsub.s32 0, %v1528
        %v1530 = vrot.slane %v1525, %v1529
        %v1532 = vmul.f32 %v1524, %v1530
        %v1533 = vld [vmem:[%s10] sm:$0x1]
        %v1535 = vlaneseq
        %v1536 = vshrl.u32 %v1535, 7
        %v1537 = vsub.s32 0, %v1536
        %v1538 = vrot.slane %v1533, %v1537
        %v1540 = vadd.f32 %v1532, %v1538
        %v1541 = vld [vmem:[%s5] sm:$0xff]
        %v1542 = vld [vmem:[%s5 + $0x8] sm:$0xff]
        %v1543 = vld [vmem:[%s5 + $0x10] sm:$0xff]
        %v1544 = vld [vmem:[%s5 + $0x18] sm:$0xff]
        %v1545 = vld [vmem:[%s6] sm:$0x1]
        %v1547 = vlaneseq
        %v1548 = vshrl.u32 %v1547, 7
        %v1549 = vsub.s32 0, %v1548
        %v1550 = vrot.slane %v1545, %v1549
        %v1553 = vsel %vm468, %v1540, 0
        %1555 = vmatprep.subr.mxu0 0.0
        %1556 = vmatpush1.msra.mxu0 %v1541
        %1557 = vmatprep.subr.mxu0 0.0
        %1558 = vmatpush1.msra.mxu0 %v1542
        %1559 = vmatprep.subr.mxu0 0.0
        %1560 = vmatpush1.msra.mxu0 %v1543
        %1561 = vmatprep.subr.mxu0 0.0
        %1562 = vmatpush1.msra.mxu0 %v1544
        %1563 = vmatprep.subr.mxu0 0.0
        %1564 = vmatpush1.msra.mxu0 0.0
        %1565 = vmatprep.subr.mxu0 0.0
        %1566 = vmatpush1.msra.mxu0 0.0
        %1567 = vmatprep.subr.mxu0 0.0
        %1568 = vmatpush1.msra.mxu0 0.0
        %1569 = vmatprep.subr.mxu0 0.0
        %1570 = vmatpush1.msra.mxu0 0.0
        %1571 = vmatprep.subr.mxu0 0.0
        %1572 = vmatpush1.msra.mxu0 0.0
        %1573 = vmatprep.subr.mxu0 0.0
        %1574 = vmatpush1.msra.mxu0 0.0
        %1575 = vmatprep.subr.mxu0 0.0
        %1576 = vmatpush1.msra.mxu0 0.0
        %1577 = vmatprep.subr.mxu0 0.0
        %1578 = vmatpush1.msra.mxu0 0.0
        %1579 = vmatprep.subr.mxu0 0.0
        %1580 = vmatpush1.msra.mxu0 0.0
        %1581 = vmatprep.subr.mxu0 0.0
        %1582 = vmatpush1.msra.mxu0 0.0
        %1583 = vmatprep.subr.mxu0 0.0
        %1584 = vmatpush1.msra.mxu0 0.0
        %1585 = vmatprep.subr.mxu0 0.0
        %1586 = vmatpush1.msra.mxu0 0.0
        %1587 = vmatprep.subr.mxu0 0.0
        %1588 = vmatpush1.msra.mxu0 0.0
        %1589 = vmatprep.subr.mxu0 0.0
        %1590 = vmatpush1.msra.mxu0 0.0
        %1591 = vmatprep.subr.mxu0 0.0
        %1592 = vmatpush1.msra.mxu0 0.0
        %1593 = vmatprep.subr.mxu0 0.0
        %1594 = vmatpush1.msra.mxu0 0.0
        %1595 = vmatprep.subr.mxu0 0.0
        %1596 = vmatpush1.msra.mxu0 0.0
        %1597 = vmatprep.subr.mxu0 0.0
        %1598 = vmatpush1.msra.mxu0 0.0
        %1599 = vmatprep.subr.mxu0 0.0
        %1600 = vmatpush1.msra.mxu0 0.0
        %1601 = vmatprep.subr.mxu0 0.0
        %1602 = vmatpush1.msra.mxu0 0.0
        %1603 = vmatprep.subr.mxu0 0.0
        %1604 = vmatpush1.msra.mxu0 0.0
        %1605 = vmatprep.subr.mxu0 0.0
        %1606 = vmatpush1.msra.mxu0 0.0
        %1607 = vmatprep.subr.mxu0 0.0
        %1608 = vmatpush1.msra.mxu0 0.0
        %1609 = vmatprep.subr.mxu0 0.0
        %1610 = vmatpush1.msra.mxu0 0.0
        %1611 = vmatprep.subr.mxu0 0.0
        %1612 = vmatpush1.msra.mxu0 0.0
        %1613 = vmatprep.subr.mxu0 0.0
        %1614 = vmatpush1.msra.mxu0 0.0
        %1615 = vmatprep.subr.mxu0 0.0
        %1616 = vmatpush1.msra.mxu0 0.0
        %1617 = vmatprep.subr.mxu0 0.0
        %1618 = vmatpush1.msra.mxu0 0.0
        %1619 = vmatprep.mubr.f32.mxu0 0.0
        %1620 = vmatmul.mubr.f32.gmra.mrb[0].mxu0 %v1553
        %v1621 = vpop.f32.mrb[0].mxu0
        %v1622 = vadd.f32 %v1550, %v1621
        %v1623 = vpop.f32.mrb[0].mxu0
        %1624 = vdwg.mxu0
        %v1625 = vmax.f32 %v1622, 0.0
        %v1626 = vld [vmem:[%s7] sm:$0xff]
        %v1627 = vld [vmem:[%s7 + $0x8] sm:$0xff]
        %v1628 = vld [vmem:[%s7 + $0x10] sm:$0xff]
        %v1629 = vld [vmem:[%s7 + $0x18] sm:$0xff]
        %v1630 = vld [vmem:[%s7 + $0x20] sm:$0xff]
        %v1631 = vld [vmem:[%s7 + $0x28] sm:$0xff]
        %v1632 = vld [vmem:[%s7 + $0x30] sm:$0xff]
        %v1633 = vld [vmem:[%s7 + $0x38] sm:$0xff]
        %v1634 = vld [vmem:[%s8] sm:$0x1]
        %v1636 = vlaneseq
        %v1637 = vshrl.u32 %v1636, 7
        %v1638 = vsub.s32 0, %v1637
        %v1639 = vrot.slane %v1634, %v1638
        %vm1641 = vcmask 523264
        %v1643 = vsel %vm1641, %v1625, 0
        %1645 = vmatprep.subr.mxu0 0.0
        %1646 = vmatpush1.msra.mxu0 %v1626
        %1647 = vmatprep.subr.mxu0 0.0
        %1648 = vmatpush1.msra.mxu0 %v1627
        %1649 = vmatprep.subr.mxu0 0.0
        %1650 = vmatpush1.msra.mxu0 %v1628
        %1651 = vmatprep.subr.mxu0 0.0
        %1652 = vmatpush1.msra.mxu0 %v1629
        %1653 = vmatprep.subr.mxu0 0.0
        %1654 = vmatpush1.msra.mxu0 %v1630
        %1655 = vmatprep.subr.mxu0 0.0
        %1656 = vmatpush1.msra.mxu0 %v1631
        %1657 = vmatprep.subr.mxu0 0.0
        %1658 = vmatpush1.msra.mxu0 %v1632
        %1659 = vmatprep.subr.mxu0 0.0
        %1660 = vmatpush1.msra.mxu0 %v1633
        %1661 = vmatprep.subr.mxu0 0.0
        %1662 = vmatpush1.msra.mxu0 0.0
        %1663 = vmatprep.subr.mxu0 0.0
        %1664 = vmatpush1.msra.mxu0 0.0
        %1665 = vmatprep.subr.mxu0 0.0
        %1666 = vmatpush1.msra.mxu0 0.0
        %1667 = vmatprep.subr.mxu0 0.0
        %1668 = vmatpush1.msra.mxu0 0.0
        %1669 = vmatprep.subr.mxu0 0.0
        %1670 = vmatpush1.msra.mxu0 0.0
        %1671 = vmatprep.subr.mxu0 0.0
        %1672 = vmatpush1.msra.mxu0 0.0
        %1673 = vmatprep.subr.mxu0 0.0
        %1674 = vmatpush1.msra.mxu0 0.0
        %1675 = vmatprep.subr.mxu0 0.0
        %1676 = vmatpush1.msra.mxu0 0.0
        %1677 = vmatprep.subr.mxu0 0.0
        %1678 = vmatpush1.msra.mxu0 0.0
        %1679 = vmatprep.subr.mxu0 0.0
        %1680 = vmatpush1.msra.mxu0 0.0
        %1681 = vmatprep.subr.mxu0 0.0
        %1682 = vmatpush1.msra.mxu0 0.0
        %1683 = vmatprep.subr.mxu0 0.0
        %1684 = vmatpush1.msra.mxu0 0.0
        %1685 = vmatprep.subr.mxu0 0.0
        %1686 = vmatpush1.msra.mxu0 0.0
        %1687 = vmatprep.subr.mxu0 0.0
        %1688 = vmatpush1.msra.mxu0 0.0
        %1689 = vmatprep.subr.mxu0 0.0
        %1690 = vmatpush1.msra.mxu0 0.0
        %1691 = vmatprep.subr.mxu0 0.0
        %1692 = vmatpush1.msra.mxu0 0.0
        %1693 = vmatprep.subr.mxu0 0.0
        %1694 = vmatpush1.msra.mxu0 0.0
        %1695 = vmatprep.subr.mxu0 0.0
        %1696 = vmatpush1.msra.mxu0 0.0
        %1697 = vmatprep.subr.mxu0 0.0
        %1698 = vmatpush1.msra.mxu0 0.0
        %1699 = vmatprep.subr.mxu0 0.0
        %1700 = vmatpush1.msra.mxu0 0.0
        %1701 = vmatprep.subr.mxu0 0.0
        %1702 = vmatpush1.msra.mxu0 0.0
        %1703 = vmatprep.subr.mxu0 0.0
        %1704 = vmatpush1.msra.mxu0 0.0
        %1705 = vmatprep.subr.mxu0 0.0
        %1706 = vmatpush1.msra.mxu0 0.0
        %1707 = vmatprep.subr.mxu0 0.0
        %1708 = vmatpush1.msra.mxu0 0.0
        %1709 = vmatprep.mubr.f32.mxu0 0.0
        %1710 = vmatmul.mubr.f32.gmra.mrb[0].mxu0 %v1643
        %v1711 = vpop.f32.mrb[0].mxu0
        %v1712 = vadd.f32 %v1639, %v1711
        %v1713 = vpop.f32.mrb[0].mxu0
        %1714 = vdwg.mxu0
        %v1715 = vadd.f32 %v1540, %v1712
        %v1716 = vsel %vm468, %v1715, 0.0
        %1717 = vadd.xlane.f32.xlu0 %v1716
        %v1718 = vpop.xlane.xlu0 %1717
        %v1719 = vmul.f32 %v1718, %v1514
        %v1720 = vsub.f32 %v1715, %v1719
        %v1721 = vmul.f32 %v1720, %v1720
        %v1722 = vsel %vm468, %v1721, 0.0
        %1723 = vadd.xlane.f32.xlu0 %v1722
        %v1724 = vpop.xlane.xlu0 %1723
        %v1725 = vmul.f32 %v1724, %v1514
        %v1726 = vadd.f32 %v1725, 1e-05
        %v1727 = vrsqrt.pop %v1726
        %v1728 = vmul.f32 %v1720, %v1727
        %v1729 = vld [vmem:[%s11] sm:$0x1]
        %v1731 = vlaneseq
        %v1732 = vshrl.u32 %v1731, 7
        %v1733 = vsub.s32 0, %v1732
        %v1734 = vrot.slane %v1729, %v1733
        %v1736 = vmul.f32 %v1728, %v1734
        %v1737 = vld [vmem:[%s12] sm:$0x1]
        %v1739 = vlaneseq
        %v1740 = vshrl.u32 %v1739, 7
        %v1741 = vsub.s32 0, %v1740
        %v1742 = vrot.slane %v1737, %v1741
        %v1744 = vadd.f32 %v1736, %v1742
        %1745 = vst.msk [vmem:[%s455] sm:$0xff] %vm468, %v1744
        %s1746 = sand.u32 %s316, 1
        %s1747 = scalar_lea.sflag [#allocation4], %s1746
        %s1748 = sand.u32 %s316, 1
        %s1749 = smul.addr %s1748, 8
        %s1750 = scalar_lea.vmem [#allocation5], %s1749
        // Predicated region
        $region77: #{tpu_custom_call.1} parent=71 // pred_check
          %p1751 = pneg %p326
        $region78: #{tpu_custom_call.1} parent=71 // pred_check_branch
          %1753 = sbr.rel (%p1751) target = $region80
        $region79: #{tpu_custom_call.1} parent=71 // pred_region
          %s1755 = ssub.s32 128, 128
          %1756 = vsyncadd %s1747, %s1755
          %s1757 = smul.addr %s30, 128
          %s1758 = scalar_lea.hbm %s13, %s1757
          %s1760 = sshll.u32 %s1750, 4
          %s1761 = int_to_ptr.vmem [resolvable:$true] %s1760
          %1763 = dma.vmem_to_hbm [thread:$0]  %s1761, 128, %s1758, %s1747
        $region80: #{tpu_custom_call.1} parent=71 // pred_fallthru
          _
      $region72: #{tpu_custom_call.1} parent=5 // pred_fallthru
        _
      %p1764 = scmp.le.s32.totalorder 2, %s25
      // Predicated region
      $region81: #{tpu_custom_call.1} parent=5 // pred_check
        %p1765 = pneg %p1764
      $region82: #{tpu_custom_call.1} parent=5 // pred_check_branch
        %1767 = sbr.rel (%p1765) target = $region84
      $region83: #{tpu_custom_call.1} parent=5 // pred_region
        %s1768 = ssub.s32 %s25, 2
        // Predicated region
        $region85: #{tpu_custom_call.1} parent=83 // pred_check
          %p1769 = pneg %p332
        $region86: #{tpu_custom_call.1} parent=83 // pred_check_branch
          %1771 = sbr.rel (%p1769) target = $region88
        $region87: #{tpu_custom_call.1} parent=83 // pred_region
          %s1772 = sand.u32 %s317, 1
          %s1773 = scalar_lea.sflag [#allocation4], %s1772
          %s1774 = sand.u32 %s317, 1
          %s1775 = smul.addr %s1774, 8
          %s1776 = scalar_lea.vmem [#allocation5], %s1775
          %1777 = dma.done %s1773, 128
        $region88: #{tpu_custom_call.1} parent=83 // pred_fallthru
          _
      $region84: #{tpu_custom_call.1} parent=5 // pred_fallthru
        _
    $region6: #{tpu_custom_call.1} parent=1 // loop_footer
      %s29 = sadd.s32 1, %s25
    $region7: #{tpu_custom_call.1} parent=1 // loop_footer_branch
      %24 = sbr.rel target = $region3
    $region8: #{tpu_custom_call.1} parent=1 // loop_exit
      _
    %1778 = vsyncpa [#allocation3], 1
    %s1779 = scalar_lea.sflag [#allocation3], 1
    %1780 = vsyncpa %s1779, 1
    %1781 = vsyncpa [#allocation4], 1
    %s1782 = scalar_lea.sflag [#allocation4], 1
    %1783 = vsyncpa %s1782, 1

</llo_original>
